<compile_context>
chip_gen: v7x
topology: tpu7x:2x2x1
jax: 0.10.0
libtpu: 0.0.40
codegen_flags: <defaults>
</compile_context>

<pallas_src>
import functools

import jax
import jax.numpy as jnp
from jax.experimental import pallas as pl
from jax.experimental.pallas import tpu as pltpu

_LANE = 128


def _output_latent_pooling_kernel(
    states_ref,    # [TB, U, C]  (native dtype)
    gumbel_ref,    # [TB, U]
    w_conf_ref,    # [1, C]
    w_log_ref,     # [C, TN]
    b_log_ref,     # [1, TN]
    out_ref,       # [TB, TN]
    selected_ref,  # scratch [TB, C] f32 (persists across the output-tile axis)
    *,
    tau: float,
):
    j = pl.program_id(1)

    # The confidence / softmax / pooling pass only depends on the batch tile,
    # not on the output tile -> compute it once per batch tile and cache it.
    @pl.when(j == 0)
    def _pool():
        states = states_ref[...].astype(jnp.float32)            # [TB, U, C]
        w_conf = w_conf_ref[...].astype(jnp.float32)             # [1, C]
        gumbel = gumbel_ref[...].astype(jnp.float32)             # [TB, U]

        # confidence_scorer(states)[..., 0]  — VPU multiply + lane reduction,
        # f32 accumulation.  (Bias dropped: it cancels in the softmax below.)
        conf = jnp.sum(states * w_conf[None, :, :], axis=-1)     # [TB, U]

        # gumbel_softmax(conf, tau, hard=False, dim=-1), exact denominator.
        y = (conf + gumbel) * (1.0 / tau)
        y = y - jnp.max(y, axis=-1, keepdims=True)
        e = jnp.exp(y)
        probs = e / jnp.sum(e, axis=-1, keepdims=True)           # [TB, U]

        # selected_states = einsum('buc,bu->bc'), f32 accumulation over U.
        selected_ref[...] = jnp.sum(states * probs[:, :, None], axis=1)

    # to_logits(selected_states): the one real MXU matmul, per output tile.
    logits = jnp.dot(
        selected_ref[...], w_log_ref[...], preferred_element_type=jnp.float32
    ) + b_log_ref[...].astype(jnp.float32)                       # [TB, TN]

    out_ref[...] = logits.astype(out_ref.dtype)


def output_latent_pooling(
    states,      # [B, U, C]
    gumbel,      # [B, U]   (gumbel noise; zeros -> 'vanilla' softmax)
    w_conf,      # [1, C]
    w_log,       # [C, O]
    b_log,       # [1, O]
    *,
    b_conf=None,               # accepted for parity; cancels in softmax -> unused
    softmax_temperature: float = 1.0,
    max_batch_tile: int | None = None,
    max_out_tile: int | None = None,
):
    del b_conf  # mathematically dead: softmax is shift-invariant along its axis
    B, U, C = states.shape
    Cw, O = w_log.shape
    assert Cw == C and b_log.shape[-1] == O and w_conf.shape == (1, C)

    # ---- output (lane) tiling: lane-dense, 128-padded, TN <= 512 -------------
    o_pad128 = max(_LANE, -(-O // _LANE) * _LANE)
    tn_cap = 512 if max_out_tile is None else max_out_tile
    tn_cap = max(_LANE, (tn_cap // _LANE) * _LANE)
    if o_pad128 <= tn_cap:
        TN, O_pad = o_pad128, o_pad128
    else:
        TN = tn_cap
        O_pad = -(-O // TN) * TN
    if O_pad != O:
        w_log = jnp.pad(w_log, ((0, 0), (0, O_pad - O)))
        b_log = jnp.pad(b_log, ((0, 0), (0, O_pad - O)))
    num_o = O_pad // TN

    # ---- generation-aware VMEM budget ----------------------------------------
    try:
        vmem_cap = int(pltpu.get_tpu_info().vmem_capacity_bytes)
    except Exception:
        vmem_cap = 64 * 1024 * 1024          # conservative (v7x per-TC) fallback
    vmem_limit = min(int(vmem_cap * 0.85), 110 * 1024 * 1024)

    s_b = jnp.dtype(states.dtype).itemsize
    g_b = jnp.dtype(gumbel.dtype).itemsize
    out_b = s_b
    wc_b = jnp.dtype(w_conf.dtype).itemsize
    wl_b = jnp.dtype(w_log.dtype).itemsize
    bl_b = jnp.dtype(b_log.dtype).itemsize

    # Resident weight bytes: w_conf single-buffered; w_log/b_log single-buffered
    # only when their block index is constant (num_o == 1).
    wlog_bufs = 1 if num_o == 1 else 2
    weight_bytes = (1 * C * wc_b) + wlog_bufs * (C * TN * wl_b + TN * bl_b)

    # Per batch-row VMEM: double-buffered streams + f32 elementwise temporaries
    # (f32 copy of the states tile + broadcast-product intermediate) + scratch.
    per_row = (
        2 * (U * C * s_b + U * g_b + TN * out_b)   # states / gumbel / out, 2-deep
        + 3 * U * C * 4                            # f32 temporaries (VPU/XLU passes)
        + C * 4                                    # selected_states scratch
    )
    avail = int((vmem_limit - weight_bytes) * 0.80) - (2 << 20)   # ~20% headroom
    avail = max(avail, per_row)
    tb = max(1, avail // per_row)
    if max_batch_tile is not None:
        tb = min(tb, max_batch_tile)

    if tb >= B:
        TB, B_pad = B, B
    else:
        TB = (tb // 256) * 256 if tb >= 256 else max(8, (tb // 8) * 8)
        B_pad = -(-B // TB) * TB
        if B_pad != B:
            states = jnp.pad(states, ((0, B_pad - B), (0, 0), (0, 0)))
            gumbel = jnp.pad(gumbel, ((0, B_pad - B), (0, 0)))

    grid = (B_pad // TB, num_o)
    kernel = functools.partial(_output_latent_pooling_kernel, tau=softmax_temperature)

    def _run(single_buffer_weights: bool):
        def resident(shape, imap, enable):
            if enable and single_buffer_weights:
                try:
                    return pl.BlockSpec(shape, imap, pipeline_mode=pl.Buffered(1))
                except Exception:
                    pass
            return pl.BlockSpec(shape, imap)

        return pl.pallas_call(
            kernel,
            out_shape=jax.ShapeDtypeStruct((B_pad, O_pad), states.dtype),
            grid_spec=pltpu.PrefetchScalarGridSpec(
                num_scalar_prefetch=0,
                grid=grid,
                in_specs=[
                    # streamed, batch-tiled operands (block index constant in j
                    # -> no re-DMA of states across output tiles)
                    pl.BlockSpec((TB, U, C), lambda i, j: (i, 0, 0)),
                    pl.BlockSpec((TB, U), lambda i, j: (i, 0)),
                    # VMEM-resident weights
                    resident((1, C), lambda i, j: (0, 0), enable=True),
                    resident((C, TN), lambda i, j: (0, j), enable=(num_o == 1)),
                    resident((1, TN), lambda i, j: (0, j), enable=(num_o == 1)),
                ],
                out_specs=pl.BlockSpec((TB, TN), lambda i, j: (i, j)),
                scratch_shapes=[pltpu.VMEM((TB, C), jnp.float32)],
            ),
            compiler_params=pltpu.CompilerParams(
                # batch axis is embarrassingly parallel (megacore on v7x);
                # output-tile axis reuses the per-batch-tile scratch -> arbitrary.
                dimension_semantics=("parallel", "arbitrary"),
                vmem_limit_bytes=vmem_limit,
            ),
        )(states, gumbel, w_conf, w_log, b_log)

    try:
        out_padded = _run(True)
    except Exception:
        # Fallback for jax/Mosaic versions that reject Buffered(1) on the
        # top-level pipeline; default double-buffering is functionally identical.
        out_padded = _run(False)

    return out_padded[:B, :O]


def _reference(states, gumbel, w_conf, b_conf, w_log, b_log, tau):
    # Pure-JAX reference mirroring the PyTorch forward (gumbel, hard=False),
    # *including* the confidence bias — proves the kernel's bias removal is exact.
    conf = jnp.einsum("buc,c->bu", states, w_conf[0]) + b_conf[0, 0]
    probs = jax.nn.softmax((conf + gumbel) / tau, axis=-1)
    selected = jnp.einsum("buc,bu->bc", states, probs)
    return selected @ w_log + b_log


if __name__ == "__main__":
    # Small shapes consistent with the module (batch, num_latents, state_dim, output_dim).
    B, U, C, O = 16, 8, 64, 192
    tau = 1.0

    key = jax.random.PRNGKey(0)
    k_states, k_wc, k_bc, k_wl, k_bl, k_gumbel = jax.random.split(key, 6)

    states = jax.random.normal(k_states, (B, U, C), dtype=jnp.float32)

    # Deterministic PyTorch-style Linear init: U(-1/sqrt(fan_in), 1/sqrt(fan_in)).
    bound = 1.0 / (C ** 0.5)
    w_conf = jax.random.uniform(k_wc, (1, C), minval=-bound, maxval=bound, dtype=jnp.float32)
    b_conf = jax.random.uniform(k_bc, (1, 1), minval=-bound, maxval=bound, dtype=jnp.float32)
    w_log = jax.random.uniform(k_wl, (C, O), minval=-bound, maxval=bound, dtype=jnp.float32)
    b_log = jax.random.uniform(k_bl, (1, O), minval=-bound, maxval=bound, dtype=jnp.float32)

    # Gumbel noise for softmax_type='gumbel' (hard=False), sampled once (glue).
    gumbel = jax.random.gumbel(k_gumbel, (B, U), dtype=jnp.float32)

    # Cap tiles so the test exercises the multi-step batch pipeline AND the
    # output-tile axis (grid = (2, 2)) at small shapes.
    out = output_latent_pooling(
        states, gumbel, w_conf, w_log, b_log,
        b_conf=b_conf, softmax_temperature=tau,
        max_batch_tile=8, max_out_tile=128,
    )
    out = jax.block_until_ready(out)

    ref = _reference(states, gumbel, w_conf, b_conf, w_log, b_log, tau)
    assert out.shape == (B, O)
    # Tolerance covers MXU f32 matmul precision; softmax itself is exact.
    assert jnp.allclose(out, ref, atol=1e-2, rtol=1e-2), "mismatch vs reference"

    print("KERNEL_OK")
</pallas_src>

<mosaic_0001>
module attributes {stable_mosaic.version = 11 : i64} {
  func.func @_output_latent_pooling_kernel(%arg0: i32, %arg1: i32, %arg2: memref<8x8x64xf32, #tpu.memory_space<vmem>>, %arg3: memref<8x8xf32, #tpu.memory_space<vmem>>, %arg4: memref<1x64xf32, #tpu.memory_space<vmem>>, %arg5: memref<64x128xf32, #tpu.memory_space<vmem>>, %arg6: memref<1x128xf32, #tpu.memory_space<vmem>>, %arg7: memref<8x128xf32, #tpu.memory_space<vmem>>, %arg8: memref<8x64xf32, #tpu.memory_space<vmem>>) attributes {dimension_semantics = [#tpu.dimension_semantics<parallel>, #tpu.dimension_semantics<arbitrary>], iteration_bounds = array<i64: 2, 2>, scalar_prefetch = 0 : i64, scratch_operands = 1 : i64, tpu.core_type = #tpu.core_type<tc>, window_params = [{transform_indices = @transform_0, window_bounds = array<i64: 8, 8, 64>}, {transform_indices = @transform_1, window_bounds = array<i64: 8, 8>}, {pipeline_mode = #tpu.pipeline_mode<synchronous>, transform_indices = @transform_2, window_bounds = array<i64: 1, 64>}, {transform_indices = @transform_3, window_bounds = array<i64: 64, 128>}, {transform_indices = @transform_4, window_bounds = array<i64: 1, 128>}, {transform_indices = @transform_5, window_bounds = array<i64: 8, 128>}]} {
    %c0_i32 = arith.constant 0 : i32
    %0 = arith.cmpi eq, %arg1, %c0_i32 : i32
    %1 = arith.extui %0 : i1 to i32
    %c0_i32_0 = arith.constant 0 : i32
    %2 = arith.cmpi ne, %1, %c0_i32_0 : i32
    scf.if %2 {
      %c0_8 = arith.constant 0 : index
      %c0_9 = arith.constant 0 : index
      %c0_10 = arith.constant 0 : index
      %10 = vector.load %arg2[%c0_8, %c0_9, %c0_10] : memref<8x8x64xf32, #tpu.memory_space<vmem>>, vector<8x8x64xf32>
      %c0_11 = arith.constant 0 : index
      %c0_12 = arith.constant 0 : index
      %11 = vector.load %arg4[%c0_11, %c0_12] : memref<1x64xf32, #tpu.memory_space<vmem>>, vector<1x64xf32>
      %c0_13 = arith.constant 0 : index
      %c0_14 = arith.constant 0 : index
      %12 = vector.load %arg3[%c0_13, %c0_14] : memref<8x8xf32, #tpu.memory_space<vmem>>, vector<8x8xf32>
      %13 = vector.shape_cast %11 : vector<1x64xf32> to vector<1x1x64xf32>
      %14 = vector.broadcast %13 : vector<1x1x64xf32> to vector<8x8x64xf32>
      %15 = arith.mulf %10, %14 : vector<8x8x64xf32>
      %cst_15 = arith.constant dense<0.000000e+00> : vector<8x8xf32>
      %16 = vector.multi_reduction <add>, %15, %cst_15 [2] : vector<8x8x64xf32> to vector<8x8xf32>
      %17 = arith.addf %16, %12 : vector<8x8xf32>
      %cst_16 = arith.constant 1.000000e+00 : f32
      %18 = vector.broadcast %cst_16 : f32 to vector<8x8xf32>
      %19 = arith.mulf %17, %18 : vector<8x8xf32>
      %cst_17 = arith.constant dense<0xFF800000> : vector<8xf32>
      %20 = vector.multi_reduction <maximumf>, %19, %cst_17 [1] : vector<8x8xf32> to vector<8xf32>
      %21 = vector.shape_cast %20 : vector<8xf32> to vector<8x1xf32>
      %22 = vector.broadcast %21 : vector<8x1xf32> to vector<8x8xf32>
      %23 = arith.subf %19, %22 : vector<8x8xf32>
      %24 = math.exp %23 : vector<8x8xf32>
      %cst_18 = arith.constant dense<0.000000e+00> : vector<8xf32>
      %25 = vector.multi_reduction <add>, %24, %cst_18 [1] : vector<8x8xf32> to vector<8xf32>
      %26 = vector.shape_cast %25 : vector<8xf32> to vector<8x1xf32>
      %27 = vector.broadcast %26 : vector<8x1xf32> to vector<8x8xf32>
      %28 = arith.divf %24, %27 : vector<8x8xf32>
      %29 = vector.shape_cast %28 : vector<8x8xf32> to vector<8x8x1xf32>
      %30 = vector.broadcast %29 : vector<8x8x1xf32> to vector<8x8x64xf32>
      %31 = arith.mulf %10, %30 : vector<8x8x64xf32>
      %cst_19 = arith.constant dense<0.000000e+00> : vector<8x64xf32>
      %32 = vector.multi_reduction <add>, %31, %cst_19 [1] : vector<8x8x64xf32> to vector<8x64xf32>
      %c0_20 = arith.constant 0 : index
      %c0_21 = arith.constant 0 : index
      %33 = vector.load %arg8[%c0_20, %c0_21] : memref<8x64xf32, #tpu.memory_space<vmem>>, vector<8x64xf32>
      tpu.vector_store %arg8[%c0_20, %c0_21], %32 {strides = array<i32>} : memref<8x64xf32, #tpu.memory_space<vmem>>, vector<8x64xf32>,
    } else {
    }
    %c0 = arith.constant 0 : index
    %c0_1 = arith.constant 0 : index
    %3 = vector.load %arg8[%c0, %c0_1] : memref<8x64xf32, #tpu.memory_space<vmem>>, vector<8x64xf32>
    %c0_2 = arith.constant 0 : index
    %c0_3 = arith.constant 0 : index
    %4 = vector.load %arg5[%c0_2, %c0_3] : memref<64x128xf32, #tpu.memory_space<vmem>>, vector<64x128xf32>
    %cst = arith.constant dense<0.000000e+00> : vector<8x128xf32>
    %5 = tpu.matmul %3, %4, %cst {dimension_numbers = #tpu.dot_dimension_numbers<[1], [0], [0], [1], [0, 0, 1, 1], [], []>} : vector<8x64xf32>, vector<64x128xf32>, vector<8x128xf32> -> vector<8x128xf32>
    %c0_4 = arith.constant 0 : index
    %c0_5 = arith.constant 0 : index
    %6 = vector.load %arg6[%c0_4, %c0_5] : memref<1x128xf32, #tpu.memory_space<vmem>>, vector<1x128xf32>
    %7 = vector.broadcast %6 : vector<1x128xf32> to vector<8x128xf32>
    %8 = arith.addf %5, %7 : vector<8x128xf32>
    %c0_6 = arith.constant 0 : index
    %c0_7 = arith.constant 0 : index
    %9 = vector.load %arg7[%c0_6, %c0_7] : memref<8x128xf32, #tpu.memory_space<vmem>>, vector<8x128xf32>
    tpu.vector_store %arg7[%c0_6, %c0_7], %8 {strides = array<i32>} : memref<8x128xf32, #tpu.memory_space<vmem>>, vector<8x128xf32>,
    return
  }
  func.func @transform_0(%arg0: i32, %arg1: i32) -> (i32, i32, i32) {
    %c0_i32 = arith.constant 0 : i32
    %c0_i32_0 = arith.constant 0 : i32
    %c0_i32_1 = arith.constant 0 : i32
    return %arg0, %c0_i32, %c0_i32_0 : i32, i32, i32
  }
  func.func @transform_1(%arg0: i32, %arg1: i32) -> (i32, i32) {
    %c0_i32 = arith.constant 0 : i32
    %c0_i32_0 = arith.constant 0 : i32
    return %arg0, %c0_i32 : i32, i32
  }
  func.func @transform_2(%arg0: i32, %arg1: i32) -> (i32, i32) {
    %c0_i32 = arith.constant 0 : i32
    %c0_i32_0 = arith.constant 0 : i32
    %c0_i32_1 = arith.constant 0 : i32
    return %c0_i32, %c0_i32_0 : i32, i32
  }
  func.func @transform_3(%arg0: i32, %arg1: i32) -> (i32, i32) {
    %c0_i32 = arith.constant 0 : i32
    %c0_i32_0 = arith.constant 0 : i32
    return %c0_i32, %arg1 : i32, i32
  }
  func.func @transform_4(%arg0: i32, %arg1: i32) -> (i32, i32) {
    %c0_i32 = arith.constant 0 : i32
    %c0_i32_0 = arith.constant 0 : i32
    return %c0_i32, %arg1 : i32, i32
  }
  func.func @transform_5(%arg0: i32, %arg1: i32) -> (i32, i32) {
    %c0_i32 = arith.constant 0 : i32
    return %arg0, %arg1 : i32, i32
  }
}

module attributes {stable_mosaic.version = 11 : i64} {
  func.func @_output_latent_pooling_kernel(%arg0: i32, %arg1: i32, %arg2: memref<8x8x64xf32, #tpu.memory_space<vmem>>, %arg3: memref<8x8xf32, #tpu.memory_space<vmem>>, %arg4: memref<1x64xf32, #tpu.memory_space<vmem>>, %arg5: memref<64x128xf32, #tpu.memory_space<vmem>>, %arg6: memref<1x128xf32, #tpu.memory_space<vmem>>, %arg7: memref<8x128xf32, #tpu.memory_space<vmem>>, %arg8: memref<8x64xf32, #tpu.memory_space<vmem>>) attributes {dimension_semantics = [#tpu.dimension_semantics<parallel>, #tpu.dimension_semantics<arbitrary>], iteration_bounds = array<i64: 2, 2>, scalar_prefetch = 0 : i64, scratch_operands = 1 : i64, tpu.core_type = #tpu.core_type<tc>, window_params = [{transform_indices = @transform_0, window_bounds = array<i64: 8, 8, 64>}, {transform_indices = @transform_1, window_bounds = array<i64: 8, 8>}, {pipeline_mode = #tpu.pipeline_mode<synchronous>, transform_indices = @transform_2, window_bounds = array<i64: 1, 64>}, {transform_indices = @transform_3, window_bounds = array<i64: 64, 128>}, {transform_indices = @transform_4, window_bounds = array<i64: 1, 128>}, {transform_indices = @transform_5, window_bounds = array<i64: 8, 128>}]} {
    %c0_i32 = arith.constant 0 : i32
    %0 = arith.cmpi eq, %arg1, %c0_i32 : i32
    %1 = arith.extui %0 : i1 to i32
    %c0_i32_0 = arith.constant 0 : i32
    %2 = arith.cmpi ne, %1, %c0_i32_0 : i32
    scf.if %2 {
      %c0_8 = arith.constant 0 : index
      %c0_9 = arith.constant 0 : index
      %c0_10 = arith.constant 0 : index
      %10 = vector.load %arg2[%c0_8, %c0_9, %c0_10] : memref<8x8x64xf32, #tpu.memory_space<vmem>>, vector<8x8x64xf32>
      %c0_11 = arith.constant 0 : index
      %c0_12 = arith.constant 0 : index
      %11 = vector.load %arg4[%c0_11, %c0_12] : memref<1x64xf32, #tpu.memory_space<vmem>>, vector<1x64xf32>
      %c0_13 = arith.constant 0 : index
      %c0_14 = arith.constant 0 : index
      %12 = vector.load %arg3[%c0_13, %c0_14] : memref<8x8xf32, #tpu.memory_space<vmem>>, vector<8x8xf32>
      %13 = vector.shape_cast %11 : vector<1x64xf32> to vector<1x1x64xf32>
      %14 = vector.broadcast %13 : vector<1x1x64xf32> to vector<8x8x64xf32>
      %15 = arith.mulf %10, %14 : vector<8x8x64xf32>
      %cst_15 = arith.constant dense<0.000000e+00> : vector<8x8xf32>
      %16 = vector.multi_reduction <add>, %15, %cst_15 [2] : vector<8x8x64xf32> to vector<8x8xf32>
      %17 = arith.addf %16, %12 : vector<8x8xf32>
      %cst_16 = arith.constant 1.000000e+00 : f32
      %18 = vector.broadcast %cst_16 : f32 to vector<8x8xf32>
      %19 = arith.mulf %17, %18 : vector<8x8xf32>
      %cst_17 = arith.constant dense<0xFF800000> : vector<8xf32>
      %20 = vector.multi_reduction <maximumf>, %19, %cst_17 [1] : vector<8x8xf32> to vector<8xf32>
      %21 = vector.shape_cast %20 : vector<8xf32> to vector<8x1xf32>
      %22 = vector.broadcast %21 : vector<8x1xf32> to vector<8x8xf32>
      %23 = arith.subf %19, %22 : vector<8x8xf32>
      %24 = math.exp %23 : vector<8x8xf32>
      %cst_18 = arith.constant dense<0.000000e+00> : vector<8xf32>
      %25 = vector.multi_reduction <add>, %24, %cst_18 [1] : vector<8x8xf32> to vector<8xf32>
      %26 = vector.shape_cast %25 : vector<8xf32> to vector<8x1xf32>
      %27 = vector.broadcast %26 : vector<8x1xf32> to vector<8x8xf32>
      %28 = arith.divf %24, %27 : vector<8x8xf32>
      %29 = vector.shape_cast %28 : vector<8x8xf32> to vector<8x8x1xf32>
      %30 = vector.broadcast %29 : vector<8x8x1xf32> to vector<8x8x64xf32>
      %31 = arith.mulf %10, %30 : vector<8x8x64xf32>
      %cst_19 = arith.constant dense<0.000000e+00> : vector<8x64xf32>
      %32 = vector.multi_reduction <add>, %31, %cst_19 [1] : vector<8x8x64xf32> to vector<8x64xf32>
      %c0_20 = arith.constant 0 : index
      %c0_21 = arith.constant 0 : index
      %33 = vector.load %arg8[%c0_20, %c0_21] : memref<8x64xf32, #tpu.memory_space<vmem>>, vector<8x64xf32>
      tpu.vector_store %arg8[%c0_20, %c0_21], %32 {strides = array<i32>} : memref<8x64xf32, #tpu.memory_space<vmem>>, vector<8x64xf32>,
    } else {
    }
    %c0 = arith.constant 0 : index
    %c0_1 = arith.constant 0 : index
    %3 = vector.load %arg8[%c0, %c0_1] : memref<8x64xf32, #tpu.memory_space<vmem>>, vector<8x64xf32>
    %c0_2 = arith.constant 0 : index
    %c0_3 = arith.constant 0 : index
    %4 = vector.load %arg5[%c0_2, %c0_3] : memref<64x128xf32, #tpu.memory_space<vmem>>, vector<64x128xf32>
    %cst = arith.constant dense<0.000000e+00> : vector<8x128xf32>
    %5 = tpu.matmul %3, %4, %cst {dimension_numbers = #tpu.dot_dimension_numbers<[1], [0], [0], [1], [0, 0, 1, 1], [], []>} : vector<8x64xf32>, vector<64x128xf32>, vector<8x128xf32> -> vector<8x128xf32>
    %c0_4 = arith.constant 0 : index
    %c0_5 = arith.constant 0 : index
    %6 = vector.load %arg6[%c0_4, %c0_5] : memref<1x128xf32, #tpu.memory_space<vmem>>, vector<1x128xf32>
    %7 = vector.broadcast %6 : vector<1x128xf32> to vector<8x128xf32>
    %8 = arith.addf %5, %7 : vector<8x128xf32>
    %c0_6 = arith.constant 0 : index
    %c0_7 = arith.constant 0 : index
    %9 = vector.load %arg7[%c0_6, %c0_7] : memref<8x128xf32, #tpu.memory_space<vmem>>, vector<8x128xf32>
    tpu.vector_store %arg7[%c0_6, %c0_7], %8 {strides = array<i32>} : memref<8x128xf32, #tpu.memory_space<vmem>>, vector<8x128xf32>,
    return
  }
  func.func @transform_0(%arg0: i32, %arg1: i32) -> (i32, i32, i32) {
    %c0_i32 = arith.constant 0 : i32
    %c0_i32_0 = arith.constant 0 : i32
    %c0_i32_1 = arith.constant 0 : i32
    return %arg0, %c0_i32, %c0_i32_0 : i32, i32, i32
  }
  func.func @transform_1(%arg0: i32, %arg1: i32) -> (i32, i32) {
    %c0_i32 = arith.constant 0 : i32
    %c0_i32_0 = arith.constant 0 : i32
    return %arg0, %c0_i32 : i32, i32
  }
  func.func @transform_2(%arg0: i32, %arg1: i32) -> (i32, i32) {
    %c0_i32 = arith.constant 0 : i32
    %c0_i32_0 = arith.constant 0 : i32
    %c0_i32_1 = arith.constant 0 : i32
    return %c0_i32, %c0_i32_0 : i32, i32
  }
  func.func @transform_3(%arg0: i32, %arg1: i32) -> (i32, i32) {
    %c0_i32 = arith.constant 0 : i32
    %c0_i32_0 = arith.constant 0 : i32
    return %c0_i32, %arg1 : i32, i32
  }
  func.func @transform_4(%arg0: i32, %arg1: i32) -> (i32, i32) {
    %c0_i32 = arith.constant 0 : i32
    %c0_i32_0 = arith.constant 0 : i32
    return %c0_i32, %arg1 : i32, i32
  }
  func.func @transform_5(%arg0: i32, %arg1: i32) -> (i32, i32) {
    %c0_i32 = arith.constant 0 : i32
    return %arg0, %arg1 : i32, i32
  }
}

</mosaic_0001>

<llo_original>
// kernel: tpu_custom_call.1
$region0: #{tpu_custom_call.1}
  #allocation0 [shape = 'u32[]', space=smem, size = 0x4, offset = 0x4, fixed_abs, tag = 'smem constant byte address 0x4 - core index']
  #allocation1 [shape = 'u32[144,128]{1,0:T(1,128)}', space=vmem, size = 0x12000, scoped, tag = 'internal scratch']
  #allocation2 [shape = 'f32[8,64]{1,0:T(8,128)}', space=vmem, size = 0x1000, scoped, tag = 'scratch operand']
  %s0 = inlined_call_operand.hbm [shape: f32[16,8,64], index: 0, kind: input, shape index: {}]
  %s1 = inlined_call_operand.vmem [shape: f32[16,8], index: 1, kind: input, shape index: {}]
  %s2 = inlined_call_operand.vmem [shape: f32[1,64], index: 2, kind: input, shape index: {}]
  %s3 = inlined_call_operand.hbm [shape: f32[64,256], index: 3, kind: input, shape index: {}]
  %s4 = inlined_call_operand.vmem [shape: f32[1,256], index: 4, kind: input, shape index: {}]
  %s5 = inlined_call_operand.hbm [shape: f32[16,256], index: 5, kind: output, shape index: {}]
  %s6 = sld [smem:[#allocation0]]
  $region65: #{tpu_custom_call.1} parent=0
    _
  %s8 = ssub.s32 1, %s6
  %s9 = scalar_select 0, %s8, %s6
  $region1: #{tpu_custom_call.1} parent=0
    #allocation3 [shape = 'u8[65536]{0}', space=vmem, size = 0x10000, scoped, tag = 'input window, operand 0']
    #allocation4 [shape = 's32[2]{0}', space=sflag, size = 0x8, scoped, tag = 'scoped memory for tpu_custom_call.1']
    #allocation5 [shape = 's32[2]{0}', space=sflag, size = 0x8, scoped, tag = 'scoped memory for tpu_custom_call.1']
    #allocation6 [shape = 'u8[65536]{0}', space=vmem, size = 0x10000, scoped, tag = 'input window, operand 3']
    #allocation7 [shape = 's32[2]{0}', space=sflag, size = 0x8, scoped, tag = 'scoped memory for tpu_custom_call.1']
    #allocation8 [shape = 'u8[8192]{0}', space=vmem, size = 0x2000, scoped, tag = 'output window, operand 0']
    %10 = vsyncpa [#allocation4], 0
    %s11 = scalar_lea.sflag [#allocation4], 1
    %12 = vsyncpa %s11, 0
    %13 = vsyncpa [#allocation7], 0
    %s14 = scalar_lea.sflag [#allocation7], 1
    %15 = vsyncpa %s14, 0
    %16 = vsyncpa [#allocation5], 0
    %s17 = scalar_lea.sflag [#allocation5], 1
    %18 = vsyncpa %s17, 0
    loop: start=0, step=1, limit=6
    $region2: #{tpu_custom_call.1} parent=1 // loop_pre_header
      _
    $region3: #{tpu_custom_call.1} parent=1 // loop_header
      %s20 = sphi 0, %s24
      %p21 = scmp.ge.s32.totalorder %s20, 6
      %s27 = sphi 0, %s39
      %s28 = sphi 0, %s35
      %s29 = sphi 0, %s27
      %s30 = sphi 0, %s28
      %s31 = sphi 0, %s29
      %s32 = sphi 0, %s30
      %s42 = sphi 0, %s44
      %s45 = sphi 0, %s42
      %s46 = sphi 0, %s45
      %s62 = sphi 0, %s46
      %s68 = sphi 0, %s70
      %s71 = sphi 0, %s68
      %s72 = sphi 0, %s71
      %s88 = sphi 0, %s72
      %s92 = sphi 0, %s92
      %s94 = sphi 0, %s92
      %s95 = sphi 0, %s94
      %s109 = sphi 0, %s95
      %s115 = sphi 0, %s117
      %s118 = sphi 0, %s115
      %s119 = sphi 0, %s118
      %s135 = sphi 0, %s119
      %s141 = sphi 0, %s143
      %s144 = sphi 0, %s141
      %s145 = sphi 0, %s144
      %s161 = sphi 0, %s145
      %s169 = sphi 0, %s171
      %s172 = sphi 0, %s169
      %s173 = sphi 0, %s172
      %s189 = sphi 0, %s173
    $region4: #{tpu_custom_call.1} parent=1 // loop_header_branch
      %23 = sbr.rel (%p21) target = $region8
    $region5: #{tpu_custom_call.1} parent=1 // loop_body
      %s25 = ssub.s32 %s20, 1
      %s26 = ssub.s32 %s20, 2
      %s33 = sadd.s32 1, %s28
      %p34 = scmp.ge.s32.totalorder %s33, 2
      %s35 = scalar_select %p34, 0, %s33
      %s36 = sadd.s32 1, %s27
      %s37 = scalar_select %p34, %s36, %s27
      %p38 = scmp.ge.s32.totalorder %s37, 2
      %s39 = scalar_select %p38, 0, %s37
      %s40 = ssub.s32 %s27, %s39
      %p41 = scmp.eq.s32.totalorder %s40, 0
      %s43 = sadd.s32 %s42, 1
      %s44 = scalar_select %p41, %s42, %s43
      %p47 = pneg %p41
      %p48 = scmp.eq.s32.totalorder %s20, 3
      %p49 = por %p47, %p48
      %p50 = scmp.ne.s32.totalorder %s42, %s45
      %p51 = scmp.eq.s32.totalorder %s20, 0
      %p52 = por %p50, %p51
      %p53 = scmp.ne.s32.totalorder %s42, %s45
      %p54 = scmp.eq.s32.totalorder %s25, 3
      %p55 = por %p53, %p54
      %p56 = scmp.ne.s32.totalorder %s45, %s46
      %p57 = scmp.eq.s32.totalorder %s25, 0
      %p58 = por %p56, %p57
      %p59 = scmp.ne.s32.totalorder %s45, %s46
      %p60 = scmp.eq.s32.totalorder %s26, 3
      %p61 = por %p59, %p60
      %p63 = scmp.ne.s32.totalorder %s46, %s62
      %p64 = scmp.eq.s32.totalorder %s26, 0
      %p65 = por %p63, %p64
      %s66 = ssub.s32 %s27, %s39
      %p67 = scmp.eq.s32.totalorder %s66, 0
      %s69 = sadd.s32 %s68, 1
      %s70 = scalar_select %p67, %s68, %s69
      %p73 = pneg %p67
      %p74 = scmp.eq.s32.totalorder %s20, 3
      %p75 = por %p73, %p74
      %p76 = scmp.ne.s32.totalorder %s68, %s71
      %p77 = scmp.eq.s32.totalorder %s20, 0
      %p78 = por %p76, %p77
      %p79 = scmp.ne.s32.totalorder %s68, %s71
      %p80 = scmp.eq.s32.totalorder %s25, 3
      %p81 = por %p79, %p80
      %p82 = scmp.ne.s32.totalorder %s71, %s72
      %p83 = scmp.eq.s32.totalorder %s25, 0
      %p84 = por %p82, %p83
      %p85 = scmp.ne.s32.totalorder %s71, %s72
      %p86 = scmp.eq.s32.totalorder %s26, 3
      %p87 = por %p85, %p86
      %p89 = scmp.ne.s32.totalorder %s72, %s88
      %p90 = scmp.eq.s32.totalorder %s26, 0
      %p91 = por %p89, %p90
      %s93 = sadd.s32 %s92, 1
      %p96 = scmp.eq.s32.totalorder %s20, 3
      %p97 = scmp.ne.s32.totalorder %s92, %s94
      %p98 = scmp.eq.s32.totalorder %s20, 0
      %p99 = por %p97, %p98
      %p100 = scmp.ne.s32.totalorder %s92, %s94
      %p101 = scmp.eq.s32.totalorder %s25, 3
      %p102 = por %p100, %p101
      %p103 = scmp.ne.s32.totalorder %s94, %s95
      %p104 = scmp.eq.s32.totalorder %s25, 0
      %p105 = por %p103, %p104
      %p106 = scmp.ne.s32.totalorder %s94, %s95
      %p107 = scmp.eq.s32.totalorder %s26, 3
      %p108 = por %p106, %p107
      %p110 = scmp.ne.s32.totalorder %s95, %s109
      %p111 = scmp.eq.s32.totalorder %s26, 0
      %p112 = por %p110, %p111
      %s113 = ssub.s32 %s28, %s35
      %p114 = scmp.eq.s32.totalorder %s113, 0
      %s116 = sadd.s32 %s115, 1
      %s117 = scalar_select %p114, %s115, %s116
      %p120 = pneg %p114
      %p121 = scmp.eq.s32.totalorder %s20, 3
      %p122 = por %p120, %p121
      %p123 = scmp.ne.s32.totalorder %s115, %s118
      %p124 = scmp.eq.s32.totalorder %s20, 0
      %p125 = por %p123, %p124
      %p126 = scmp.ne.s32.totalorder %s115, %s118
      %p127 = scmp.eq.s32.totalorder %s25, 3
      %p128 = por %p126, %p127
      %p129 = scmp.ne.s32.totalorder %s118, %s119
      %p130 = scmp.eq.s32.totalorder %s25, 0
      %p131 = por %p129, %p130
      %p132 = scmp.ne.s32.totalorder %s118, %s119
      %p133 = scmp.eq.s32.totalorder %s26, 3
      %p134 = por %p132, %p133
      %p136 = scmp.ne.s32.totalorder %s119, %s135
      %p137 = scmp.eq.s32.totalorder %s26, 0
      %p138 = por %p136, %p137
      %s139 = ssub.s32 %s28, %s35
      %p140 = scmp.eq.s32.totalorder %s139, 0
      %s142 = sadd.s32 %s141, 1
      %s143 = scalar_select %p140, %s141, %s142
      %p146 = pneg %p140
      %p147 = scmp.eq.s32.totalorder %s20, 3
      %p148 = por %p146, %p147
      %p149 = scmp.ne.s32.totalorder %s141, %s144
      %p150 = scmp.eq.s32.totalorder %s20, 0
      %p151 = por %p149, %p150
      %p152 = scmp.ne.s32.totalorder %s141, %s144
      %p153 = scmp.eq.s32.totalorder %s25, 3
      %p154 = por %p152, %p153
      %p155 = scmp.ne.s32.totalorder %s144, %s145
      %p156 = scmp.eq.s32.totalorder %s25, 0
      %p157 = por %p155, %p156
      %p158 = scmp.ne.s32.totalorder %s144, %s145
      %p159 = scmp.eq.s32.totalorder %s26, 3
      %p160 = por %p158, %p159
      %p162 = scmp.ne.s32.totalorder %s145, %s161
      %p163 = scmp.eq.s32.totalorder %s26, 0
      %p164 = por %p162, %p163
      %s165 = ssub.s32 %s27, %s39
      %s166 = ssub.s32 %s28, %s35
      %s167 = sor.u32 %s165, %s166
      %p168 = scmp.eq.s32.totalorder %s167, 0
      %s170 = sadd.s32 %s169, 1
      %s171 = scalar_select %p168, %s169, %s170
      %p174 = pneg %p168
      %p175 = scmp.eq.s32.totalorder %s20, 3
      %p176 = por %p174, %p175
      %p177 = scmp.ne.s32.totalorder %s169, %s172
      %p178 = scmp.eq.s32.totalorder %s20, 0
      %p179 = por %p177, %p178
      %p180 = scmp.ne.s32.totalorder %s169, %s172
      %p181 = scmp.eq.s32.totalorder %s25, 3
      %p182 = por %p180, %p181
      %p183 = scmp.ne.s32.totalorder %s172, %s173
      %p184 = scmp.eq.s32.totalorder %s25, 0
      %p185 = por %p183, %p184
      %p186 = scmp.ne.s32.totalorder %s172, %s173
      %p187 = scmp.eq.s32.totalorder %s26, 3
      %p188 = por %p186, %p187
      %p190 = scmp.ne.s32.totalorder %s173, %s189
      %p191 = scmp.eq.s32.totalorder %s26, 0
      %p192 = por %p190, %p191
      %p193 = scmp.le.s32.totalorder 1, %s20
      %p194 = scmp.lt.s32.totalorder %s20, 5
      %p195 = pnand %p193, %p194
      %p196 = pneg %p195
      // Predicated region
      $region9: #{tpu_custom_call.1} parent=5 // pred_check
        _
      $region10: #{tpu_custom_call.1} parent=5 // pred_check_branch
        %198 = sbr.rel (%p195) target = $region12
      $region11: #{tpu_custom_call.1} parent=5 // pred_region
        %s199 = ssub.s32 %s20, 1
        // Predicated region
        $region13: #{tpu_custom_call.1} parent=11 // pred_check
          %p200 = pneg %p105
        $region14: #{tpu_custom_call.1} parent=11 // pred_check_branch
          %202 = sbr.rel (%p200) target = $region16
        $region15: #{tpu_custom_call.1} parent=11 // pred_region
          _
        $region16: #{tpu_custom_call.1} parent=11 // pred_fallthru
          _
      $region12: #{tpu_custom_call.1} parent=5 // pred_fallthru
        _
      %p203 = scmp.lt.s32.totalorder %s20, 4
      // Predicated region
      $region17: #{tpu_custom_call.1} parent=5 // pred_check
        %p204 = pneg %p203
      $region18: #{tpu_custom_call.1} parent=5 // pred_check_branch
        %206 = sbr.rel (%p204) target = $region20
      $region19: #{tpu_custom_call.1} parent=5 // pred_region
        // Predicated region
        $region21: #{tpu_custom_call.1} parent=19 // pred_check
          %p207 = pneg %p52
        $region22: #{tpu_custom_call.1} parent=19 // pred_check_branch
          %209 = sbr.rel (%p207) target = $region24
        $region23: #{tpu_custom_call.1} parent=19 // pred_region
          %s210 = sand.u32 %s42, 1
          %s211 = scalar_lea.sflag [#allocation4], %s210
          %s212 = sand.u32 %s42, 1
          %s213 = smul.addr %s212, 64
          %s214 = scalar_lea.vmem [#allocation3], %s213
          %s215 = smul.u32 8, %s27
          %s217 = ssub.s32 1024, 1024
          %218 = vsyncadd %s211, %s217
          %s219 = smul.addr %s215, 128
          %s220 = scalar_lea.hbm %s0, %s219
          %s221 = sshll.u32 %s214, 4
          %s222 = int_to_ptr.vmem [resolvable:$true] %s221
          %227 = dma.hbm_to_vmem [thread:$0]  %s220, 1024, %s222, %s211, 128, 128, 8
        $region24: #{tpu_custom_call.1} parent=19 // pred_fallthru
          _
        // Predicated region
        $region25: #{tpu_custom_call.1} parent=19 // pred_check
          %p228 = pneg %p78
        $region26: #{tpu_custom_call.1} parent=19 // pred_check_branch
          %230 = sbr.rel (%p228) target = $region28
        $region27: #{tpu_custom_call.1} parent=19 // pred_region
          %p231 = scmp.lt.s32.totalorder %s27, 1
          %s232 = scalar_select %p231, %s27, 1
          %s233 = smul.addr %s232, 8
          %s234 = scalar_lea.vmem %s1, %s233
        $region28: #{tpu_custom_call.1} parent=19 // pred_fallthru
          _
        // Predicated region
        $region29: #{tpu_custom_call.1} parent=19 // pred_check
          %p235 = pneg %p125
        $region30: #{tpu_custom_call.1} parent=19 // pred_check_branch
          %237 = sbr.rel (%p235) target = $region32
        $region31: #{tpu_custom_call.1} parent=19 // pred_region
          %s238 = sand.u32 %s115, 1
          %s239 = scalar_lea.sflag [#allocation7], %s238
          %s240 = sand.u32 %s115, 1
          %s241 = smul.addr %s240, 64
          %s242 = scalar_lea.vmem [#allocation6], %s241
          %s244 = ssub.s32 1024, 1024
          %245 = vsyncadd %s239, %s244
          %s246 = smul.addr %s28, 128
          %s247 = scalar_lea.hbm %s3, %s246
          %s248 = sshll.u32 %s242, 4
          %s249 = int_to_ptr.vmem [resolvable:$true] %s248
          %254 = dma.hbm_to_vmem [thread:$0]  %s247, 1024, %s249, %s239, 256, 128, 8
        $region32: #{tpu_custom_call.1} parent=19 // pred_fallthru
          _
        // Predicated region
        $region33: #{tpu_custom_call.1} parent=19 // pred_check
          %p255 = pneg %p151
        $region34: #{tpu_custom_call.1} parent=19 // pred_check_branch
          %257 = sbr.rel (%p255) target = $region36
        $region35: #{tpu_custom_call.1} parent=19 // pred_region
          %p258 = scmp.lt.s32.totalorder %s28, 1
          %s259 = scalar_select %p258, %s28, 1
          %s260 = scalar_lea.vmem %s4, %s259
        $region36: #{tpu_custom_call.1} parent=19 // pred_fallthru
          _
      $region20: #{tpu_custom_call.1} parent=5 // pred_fallthru
        _
      %p261 = scmp.le.s32.totalorder 1, %s20
      %p262 = scmp.lt.s32.totalorder %s20, 5
      %p263 = pnand %p261, %p262
      %p264 = pneg %p263
      // Predicated region
      $region37: #{tpu_custom_call.1} parent=5 // pred_check
        _
      $region38: #{tpu_custom_call.1} parent=5 // pred_check_branch
        %266 = sbr.rel (%p263) target = $region40
      $region39: #{tpu_custom_call.1} parent=5 // pred_region
        %s267 = ssub.s32 %s20, 1
        %s268 = sand.u32 %s45, 1
        %s269 = scalar_lea.sflag [#allocation4], %s268
        %s270 = sand.u32 %s45, 1
        %s271 = smul.addr %s270, 64
        %s272 = scalar_lea.vmem [#allocation3], %s271
        // Predicated region
        $region41: #{tpu_custom_call.1} parent=39 // pred_check
          %p273 = pneg %p58
        $region42: #{tpu_custom_call.1} parent=39 // pred_check_branch
          %275 = sbr.rel (%p273) target = $region44
        $region43: #{tpu_custom_call.1} parent=39 // pred_region
          %276 = dma.done %s269, 1024
        $region44: #{tpu_custom_call.1} parent=39 // pred_fallthru
          _
        %s277 = sand.u32 %s118, 1
        %s278 = scalar_lea.sflag [#allocation7], %s277
        %s279 = sand.u32 %s118, 1
        %s280 = smul.addr %s279, 64
        %s281 = scalar_lea.vmem [#allocation6], %s280
        // Predicated region
        $region45: #{tpu_custom_call.1} parent=39 // pred_check
          %p282 = pneg %p131
        $region46: #{tpu_custom_call.1} parent=39 // pred_check_branch
          %284 = sbr.rel (%p282) target = $region48
        $region47: #{tpu_custom_call.1} parent=39 // pred_region
          %285 = dma.done %s278, 1024
        $region48: #{tpu_custom_call.1} parent=39 // pred_fallthru
          _
        %s286 = sand.u32 %s45, 1
        %s287 = scalar_lea.sflag [#allocation4], %s286
        %s288 = sand.u32 %s45, 1
        %s289 = smul.addr %s288, 64
        %s290 = scalar_lea.vmem [#allocation3], %s289
        %p291 = pneg %p58
        %p292 = pneg %p55
        %p293 = scmp.lt.s32.totalorder %s29, 1
        %s294 = scalar_select %p293, %s29, 1
        %s295 = smul.addr %s294, 8
        %s296 = scalar_lea.vmem %s1, %s295
        %p297 = pneg %p84
        %p298 = pneg %p81
        %p299 = pneg %p105
        %p300 = pneg %p102
        %s301 = sand.u32 %s118, 1
        %s302 = scalar_lea.sflag [#allocation7], %s301
        %s303 = sand.u32 %s118, 1
        %s304 = smul.addr %s303, 64
        %s305 = scalar_lea.vmem [#allocation6], %s304
        %p306 = pneg %p131
        %p307 = pneg %p128
        %p308 = scmp.lt.s32.totalorder %s30, 1
        %s309 = scalar_select %p308, %s30, 1
        %s310 = scalar_lea.vmem %s4, %s309
        %p311 = pneg %p157
        %p312 = pneg %p154
        %p313 = pneg %p185
        %p314 = pneg %p182
        %s315 = sand.u32 %s172, 1
        %s316 = scalar_lea.sflag [#allocation5], %s315
        %s317 = sand.u32 %s172, 1
        %s318 = smul.addr %s317, 8
        %s319 = scalar_lea.vmem [#allocation8], %s318
        %s320 = smul.u32 8, %s29
        %p321 = scmp.lt.s32.totalorder %s29, 1
        %s322 = scalar_select %p321, %s29, 1
        %s323 = smul.addr %s322, 8
        %s324 = scalar_lea.vmem %s1, %s323
        %p325 = scmp.lt.s32.totalorder %s30, 1
        %s326 = scalar_select %p325, %s30, 1
        %s327 = scalar_lea.vmem %s4, %s326
        %p328 = scmp.eq.s32.totalorder %s30, 0
        // Predicated region
        $region49: #{tpu_custom_call.1} parent=39 // pred_check
          %p329 = pneg %p328
        $region50: #{tpu_custom_call.1} parent=39 // pred_check_branch
          %331 = sbr.rel (%p329) target = $region52
        $region51: #{tpu_custom_call.1} parent=39 // pred_region
          %v332 = vld [vmem:[%s272] sm:$0xff]
          %v333 = vld [vmem:[%s272 + $0x8] sm:$0xff]
          %v334 = vld [vmem:[%s272 + $0x10] sm:$0xff]
          %v335 = vld [vmem:[%s272 + $0x18] sm:$0xff]
          %v336 = vld [vmem:[%s272 + $0x20] sm:$0xff]
          %v337 = vld [vmem:[%s272 + $0x28] sm:$0xff]
          %v338 = vld [vmem:[%s272 + $0x30] sm:$0xff]
          %v339 = vld [vmem:[%s272 + $0x38] sm:$0xff]
          %v340 = vld [vmem:[%s2] sm:$0x1]
          %v341 = vld [vmem:[%s324] sm:$0xff]
          %v343 = vlaneseq
          %v344 = vshrl.u32 %v343, 7
          %v345 = vsub.s32 0, %v344
          %v346 = vrot.slane %v340, %v345
          %v348 = vmul.f32 %v332, %v346
          %v349 = vmul.f32 %v333, %v346
          %v350 = vmul.f32 %v334, %v346
          %v351 = vmul.f32 %v335, %v346
          %v352 = vmul.f32 %v336, %v346
          %v353 = vmul.f32 %v337, %v346
          %v354 = vmul.f32 %v338, %v346
          %v355 = vmul.f32 %v339, %v346
          %vm356 = vcmask 523264
          %v357 = vsel %vm356, %v348, 0.0
          %358 = vadd.xlane.f32.xlu0 %v357
          %v359 = vpop.xlane.xlu0 %358
          %v360 = vsel %vm356, %v349, 0.0
          %361 = vadd.xlane.f32.xlu0 %v360
          %v362 = vpop.xlane.xlu0 %361
          %v363 = vsel %vm356, %v350, 0.0
          %364 = vadd.xlane.f32.xlu0 %v363
          %v365 = vpop.xlane.xlu0 %364
          %v366 = vsel %vm356, %v351, 0.0
          %367 = vadd.xlane.f32.xlu0 %v366
          %v368 = vpop.xlane.xlu0 %367
          %v369 = vsel %vm356, %v352, 0.0
          %370 = vadd.xlane.f32.xlu0 %v369
          %v371 = vpop.xlane.xlu0 %370
          %v372 = vsel %vm356, %v353, 0.0
          %373 = vadd.xlane.f32.xlu0 %v372
          %v374 = vpop.xlane.xlu0 %373
          %v375 = vsel %vm356, %v354, 0.0
          %376 = vadd.xlane.f32.xlu0 %v375
          %v377 = vpop.xlane.xlu0 %376
          %v378 = vsel %vm356, %v355, 0.0
          %379 = vadd.xlane.f32.xlu0 %v378
          %v380 = vpop.xlane.xlu0 %379
          %v382 = vlaneseq
          %v383 = vshrl.u32 %v382, 7
          %v384 = vsub.s32 0, %v383
          %v385 = vrot.slane %v341, %v384
          %387 = vbcast.lane.b32.xlu0 %v385, 256
          %v388 = vpop.permute.xlu0 %387
          %v389 = vlaneseq
          %v390 = vshrl.u32 %v389, 7
          %v391 = vsub.s32 1, %v390
          %v392 = vrot.slane %v341, %v391
          %394 = vbcast.lane.b32.xlu0 %v392, 256
          %v395 = vpop.permute.xlu0 %394
          %v396 = vlaneseq
          %v397 = vshrl.u32 %v396, 7
          %v398 = vsub.s32 2, %v397
          %v399 = vrot.slane %v341, %v398
          %401 = vbcast.lane.b32.xlu0 %v399, 256
          %v402 = vpop.permute.xlu0 %401
          %v403 = vlaneseq
          %v404 = vshrl.u32 %v403, 7
          %v405 = vsub.s32 3, %v404
          %v406 = vrot.slane %v341, %v405
          %408 = vbcast.lane.b32.xlu0 %v406, 256
          %v409 = vpop.permute.xlu0 %408
          %v410 = vlaneseq
          %v411 = vshrl.u32 %v410, 7
          %v412 = vsub.s32 4, %v411
          %v413 = vrot.slane %v341, %v412
          %415 = vbcast.lane.b32.xlu0 %v413, 256
          %v416 = vpop.permute.xlu0 %415
          %v417 = vlaneseq
          %v418 = vshrl.u32 %v417, 7
          %v419 = vsub.s32 5, %v418
          %v420 = vrot.slane %v341, %v419
          %422 = vbcast.lane.b32.xlu0 %v420, 256
          %v423 = vpop.permute.xlu0 %422
          %v424 = vlaneseq
          %v425 = vshrl.u32 %v424, 7
          %v426 = vsub.s32 6, %v425
          %v427 = vrot.slane %v341, %v426
          %429 = vbcast.lane.b32.xlu0 %v427, 256
          %v430 = vpop.permute.xlu0 %429
          %v431 = vlaneseq
          %v432 = vshrl.u32 %v431, 7
          %v433 = vsub.s32 7, %v432
          %v434 = vrot.slane %v341, %v433
          %436 = vbcast.lane.b32.xlu0 %v434, 256
          %v437 = vpop.permute.xlu0 %436
          %v446 = vadd.f32 %v359, %v388
          %v447 = vadd.f32 %v362, %v395
          %v448 = vadd.f32 %v365, %v402
          %v449 = vadd.f32 %v368, %v409
          %v450 = vadd.f32 %v371, %v416
          %v451 = vadd.f32 %v374, %v423
          %v452 = vadd.f32 %v377, %v430
          %v453 = vadd.f32 %v380, %v437
          %462 = vset.pattern.permute.xlu0 0
          %463 = vperm.xlu0 %462, %v446
          %v464 = vpop.permute.xlu0 %463
          %465 = vset.pattern.permute.xlu0 0
          %466 = vperm.xlu0 %465, %v447
          %v467 = vpop.permute.xlu0 %466
          %468 = vset.pattern.permute.xlu0 0
          %469 = vperm.xlu0 %468, %v448
          %v470 = vpop.permute.xlu0 %469
          %471 = vset.pattern.permute.xlu0 0
          %472 = vperm.xlu0 %471, %v449
          %v473 = vpop.permute.xlu0 %472
          %474 = vset.pattern.permute.xlu0 0
          %475 = vperm.xlu0 %474, %v450
          %v476 = vpop.permute.xlu0 %475
          %477 = vset.pattern.permute.xlu0 0
          %478 = vperm.xlu0 %477, %v451
          %v479 = vpop.permute.xlu0 %478
          %480 = vset.pattern.permute.xlu0 0
          %481 = vperm.xlu0 %480, %v452
          %v482 = vpop.permute.xlu0 %481
          %483 = vset.pattern.permute.xlu0 0
          %484 = vperm.xlu0 %483, %v453
          %v485 = vpop.permute.xlu0 %484
          %v486 = vlaneseq
          %v487 = vand.u32 %v486, 127
          %v488 = vlaneseq
          %v489 = vshrl.u32 %v488, 7
          %v490 = vsub.s32 %v487, %v489
          %v491 = vrot.slane %v464, %v490
          %v492 = vlaneseq
          %v493 = vshrl.u32 %v492, 7
          %v494 = vsub.s32 %v487, %v493
          %v495 = vrot.slane %v467, %v494
          %v496 = vlaneseq
          %v497 = vshrl.u32 %v496, 7
          %v498 = vsub.s32 %v487, %v497
          %v499 = vrot.slane %v470, %v498
          %v500 = vlaneseq
          %v501 = vshrl.u32 %v500, 7
          %v502 = vsub.s32 %v487, %v501
          %v503 = vrot.slane %v473, %v502
          %v504 = vlaneseq
          %v505 = vshrl.u32 %v504, 7
          %v506 = vsub.s32 %v487, %v505
          %v507 = vrot.slane %v476, %v506
          %v508 = vlaneseq
          %v509 = vshrl.u32 %v508, 7
          %v510 = vsub.s32 %v487, %v509
          %v511 = vrot.slane %v479, %v510
          %v512 = vlaneseq
          %v513 = vshrl.u32 %v512, 7
          %v514 = vsub.s32 %v487, %v513
          %v515 = vrot.slane %v482, %v514
          %v516 = vlaneseq
          %v517 = vshrl.u32 %v516, 7
          %v518 = vsub.s32 %v487, %v517
          %v519 = vrot.slane %v485, %v518
          %vm520 = vcmask 1041409
          %v521 = vsel %vm520, %v495, %v491
          %vm522 = vcmask 1042434
          %v523 = vsel %vm522, %v499, %v521
          %vm524 = vcmask 1043459
          %v525 = vsel %vm524, %v503, %v523
          %vm526 = vcmask 1044484
          %v527 = vsel %vm526, %v507, %v525
          %vm528 = vcmask 1045509
          %v529 = vsel %vm528, %v511, %v527
          %vm530 = vcmask 1046534
          %v531 = vsel %vm530, %v515, %v529
          %vm532 = vcmask 1047559
          %v533 = vsel %vm532, %v519, %v531
          %vm535 = vcmask 64512
          %v536 = vsel %vm535, %v533, -inf
          %537 = vmax.xlane.f32.xlu0 %v536
          %v538 = vpop.xlane.xlu0 %537
          %v540 = vlaneseq
          %v541 = vshrl.u32 %v540, 7
          %v542 = vsub.s32 0, %v541
          %v543 = vrot.slane %v538, %v542
          %v544 = vlaneseq
          %v545 = vshrl.u32 %v544, 7
          %v546 = vsub.s32 1, %v545
          %v547 = vrot.slane %v538, %v546
          %v548 = vlaneseq
          %v549 = vshrl.u32 %v548, 7
          %v550 = vsub.s32 2, %v549
          %v551 = vrot.slane %v538, %v550
          %v552 = vlaneseq
          %v553 = vshrl.u32 %v552, 7
          %v554 = vsub.s32 3, %v553
          %v555 = vrot.slane %v538, %v554
          %v556 = vlaneseq
          %v557 = vshrl.u32 %v556, 7
          %v558 = vsub.s32 4, %v557
          %v559 = vrot.slane %v538, %v558
          %v560 = vlaneseq
          %v561 = vshrl.u32 %v560, 7
          %v562 = vsub.s32 5, %v561
          %v563 = vrot.slane %v538, %v562
          %v564 = vlaneseq
          %v565 = vshrl.u32 %v564, 7
          %v566 = vsub.s32 6, %v565
          %v567 = vrot.slane %v538, %v566
          %v568 = vlaneseq
          %v569 = vshrl.u32 %v568, 7
          %v570 = vsub.s32 7, %v569
          %v571 = vrot.slane %v538, %v570
          %v580 = vsub.f32 %v446, %v543
          %v581 = vsub.f32 %v447, %v547
          %v582 = vsub.f32 %v448, %v551
          %v583 = vsub.f32 %v449, %v555
          %v584 = vsub.f32 %v450, %v559
          %v585 = vsub.f32 %v451, %v563
          %v586 = vsub.f32 %v452, %v567
          %v587 = vsub.f32 %v453, %v571
          %v588 = vmul.f32 %v580, 1.442695
          %v589 = vpow.pop %v588
          %v590 = vmul.f32 %v581, 1.442695
          %v591 = vpow.pop %v590
          %v592 = vmul.f32 %v582, 1.442695
          %v593 = vpow.pop %v592
          %v594 = vmul.f32 %v583, 1.442695
          %v595 = vpow.pop %v594
          %v596 = vmul.f32 %v584, 1.442695
          %v597 = vpow.pop %v596
          %v598 = vmul.f32 %v585, 1.442695
          %v599 = vpow.pop %v598
          %v600 = vmul.f32 %v586, 1.442695
          %v601 = vpow.pop %v600
          %v602 = vmul.f32 %v587, 1.442695
          %v603 = vpow.pop %v602
          %612 = vset.pattern.permute.xlu0 0
          %613 = vperm.xlu0 %612, %v589
          %v614 = vpop.permute.xlu0 %613
          %615 = vset.pattern.permute.xlu0 0
          %616 = vperm.xlu0 %615, %v591
          %v617 = vpop.permute.xlu0 %616
          %618 = vset.pattern.permute.xlu0 0
          %619 = vperm.xlu0 %618, %v593
          %v620 = vpop.permute.xlu0 %619
          %621 = vset.pattern.permute.xlu0 0
          %622 = vperm.xlu0 %621, %v595
          %v623 = vpop.permute.xlu0 %622
          %624 = vset.pattern.permute.xlu0 0
          %625 = vperm.xlu0 %624, %v597
          %v626 = vpop.permute.xlu0 %625
          %627 = vset.pattern.permute.xlu0 0
          %628 = vperm.xlu0 %627, %v599
          %v629 = vpop.permute.xlu0 %628
          %630 = vset.pattern.permute.xlu0 0
          %631 = vperm.xlu0 %630, %v601
          %v632 = vpop.permute.xlu0 %631
          %633 = vset.pattern.permute.xlu0 0
          %634 = vperm.xlu0 %633, %v603
          %v635 = vpop.permute.xlu0 %634
          %v636 = vlaneseq
          %v637 = vshrl.u32 %v636, 7
          %v638 = vsub.s32 %v487, %v637
          %v639 = vrot.slane %v614, %v638
          %v640 = vlaneseq
          %v641 = vshrl.u32 %v640, 7
          %v642 = vsub.s32 %v487, %v641
          %v643 = vrot.slane %v617, %v642
          %v644 = vlaneseq
          %v645 = vshrl.u32 %v644, 7
          %v646 = vsub.s32 %v487, %v645
          %v647 = vrot.slane %v620, %v646
          %v648 = vlaneseq
          %v649 = vshrl.u32 %v648, 7
          %v650 = vsub.s32 %v487, %v649
          %v651 = vrot.slane %v623, %v650
          %v652 = vlaneseq
          %v653 = vshrl.u32 %v652, 7
          %v654 = vsub.s32 %v487, %v653
          %v655 = vrot.slane %v626, %v654
          %v656 = vlaneseq
          %v657 = vshrl.u32 %v656, 7
          %v658 = vsub.s32 %v487, %v657
          %v659 = vrot.slane %v629, %v658
          %v660 = vlaneseq
          %v661 = vshrl.u32 %v660, 7
          %v662 = vsub.s32 %v487, %v661
          %v663 = vrot.slane %v632, %v662
          %v664 = vlaneseq
          %v665 = vshrl.u32 %v664, 7
          %v666 = vsub.s32 %v487, %v665
          %v667 = vrot.slane %v635, %v666
          %v668 = vsel %vm520, %v643, %v639
          %v669 = vsel %vm522, %v647, %v668
          %v670 = vsel %vm524, %v651, %v669
          %v671 = vsel %vm526, %v655, %v670
          %v672 = vsel %vm528, %v659, %v671
          %v673 = vsel %vm530, %v663, %v672
          %v674 = vsel %vm532, %v667, %v673
          %v676 = vsel %vm535, %v674, 0.0
          %677 = vadd.xlane.f32.xlu0 %v676
          %v678 = vpop.xlane.xlu0 %677
          %v680 = vlaneseq
          %v681 = vshrl.u32 %v680, 7
          %v682 = vsub.s32 0, %v681
          %v683 = vrot.slane %v678, %v682
          %v684 = vlaneseq
          %v685 = vshrl.u32 %v684, 7
          %v686 = vsub.s32 1, %v685
          %v687 = vrot.slane %v678, %v686
          %v688 = vlaneseq
          %v689 = vshrl.u32 %v688, 7
          %v690 = vsub.s32 2, %v689
          %v691 = vrot.slane %v678, %v690
          %v692 = vlaneseq
          %v693 = vshrl.u32 %v692, 7
          %v694 = vsub.s32 3, %v693
          %v695 = vrot.slane %v678, %v694
          %v696 = vlaneseq
          %v697 = vshrl.u32 %v696, 7
          %v698 = vsub.s32 4, %v697
          %v699 = vrot.slane %v678, %v698
          %v700 = vlaneseq
          %v701 = vshrl.u32 %v700, 7
          %v702 = vsub.s32 5, %v701
          %v703 = vrot.slane %v678, %v702
          %v704 = vlaneseq
          %v705 = vshrl.u32 %v704, 7
          %v706 = vsub.s32 6, %v705
          %v707 = vrot.slane %v678, %v706
          %v708 = vlaneseq
          %v709 = vshrl.u32 %v708, 7
          %v710 = vsub.s32 7, %v709
          %v711 = vrot.slane %v678, %v710
          %v720 = vrcp.pop %v683
          %v721 = vmul.f32 %v589, %v720
          %v722 = vrcp.pop %v687
          %v723 = vmul.f32 %v591, %v722
          %v724 = vrcp.pop %v691
          %v725 = vmul.f32 %v593, %v724
          %v726 = vrcp.pop %v695
          %v727 = vmul.f32 %v595, %v726
          %v728 = vrcp.pop %v699
          %v729 = vmul.f32 %v597, %v728
          %v730 = vrcp.pop %v703
          %v731 = vmul.f32 %v599, %v730
          %v732 = vrcp.pop %v707
          %v733 = vmul.f32 %v601, %v732
          %v734 = vrcp.pop %v711
          %v735 = vmul.f32 %v603, %v734
          %737 = vset.pattern.permute.xlu0 0
          %738 = vperm.xlu0 %737, %v721
          %v739 = vpop.permute.xlu0 %738
          %742 = vset.pattern.permute.xlu0 0
          %743 = vperm.xlu0 %742, %v723
          %v744 = vpop.permute.xlu0 %743
          %747 = vset.pattern.permute.xlu0 0
          %748 = vperm.xlu0 %747, %v725
          %v749 = vpop.permute.xlu0 %748
          %752 = vset.pattern.permute.xlu0 0
          %753 = vperm.xlu0 %752, %v727
          %v754 = vpop.permute.xlu0 %753
          %757 = vset.pattern.permute.xlu0 0
          %758 = vperm.xlu0 %757, %v729
          %v759 = vpop.permute.xlu0 %758
          %762 = vset.pattern.permute.xlu0 0
          %763 = vperm.xlu0 %762, %v731
          %v764 = vpop.permute.xlu0 %763
          %767 = vset.pattern.permute.xlu0 0
          %768 = vperm.xlu0 %767, %v733
          %v769 = vpop.permute.xlu0 %768
          %772 = vset.pattern.permute.xlu0 0
          %773 = vperm.xlu0 %772, %v735
          %v774 = vpop.permute.xlu0 %773
          %v776 = vmul.f32 %v332, %v739
          %v777 = vmul.f32 %v333, %v744
          %v778 = vmul.f32 %v334, %v749
          %v779 = vmul.f32 %v335, %v754
          %v780 = vmul.f32 %v336, %v759
          %v781 = vmul.f32 %v337, %v764
          %v782 = vmul.f32 %v338, %v769
          %v783 = vmul.f32 %v339, %v774
          %v784 = vsel %vm356, %v776, 0.0
          %v785 = vrot.slane %v784, 4
          %v786 = vadd.f32 %v784, %v785
          %v787 = vrot.slane %v786, 2
          %v788 = vadd.f32 %v786, %v787
          %v789 = vrot.slane %v788, 1
          %v790 = vadd.f32 %v788, %v789
          %v791 = vsel %vm356, %v777, 0.0
          %v792 = vrot.slane %v791, 4
          %v793 = vadd.f32 %v791, %v792
          %v794 = vrot.slane %v793, 2
          %v795 = vadd.f32 %v793, %v794
          %v796 = vrot.slane %v795, 1
          %v797 = vadd.f32 %v795, %v796
          %v798 = vsel %vm356, %v778, 0.0
          %v799 = vrot.slane %v798, 4
          %v800 = vadd.f32 %v798, %v799
          %v801 = vrot.slane %v800, 2
          %v802 = vadd.f32 %v800, %v801
          %v803 = vrot.slane %v802, 1
          %v804 = vadd.f32 %v802, %v803
          %v805 = vsel %vm356, %v779, 0.0
          %v806 = vrot.slane %v805, 4
          %v807 = vadd.f32 %v805, %v806
          %v808 = vrot.slane %v807, 2
          %v809 = vadd.f32 %v807, %v808
          %v810 = vrot.slane %v809, 1
          %v811 = vadd.f32 %v809, %v810
          %v812 = vsel %vm356, %v780, 0.0
          %v813 = vrot.slane %v812, 4
          %v814 = vadd.f32 %v812, %v813
          %v815 = vrot.slane %v814, 2
          %v816 = vadd.f32 %v814, %v815
          %v817 = vrot.slane %v816, 1
          %v818 = vadd.f32 %v816, %v817
          %v819 = vsel %vm356, %v781, 0.0
          %v820 = vrot.slane %v819, 4
          %v821 = vadd.f32 %v819, %v820
          %v822 = vrot.slane %v821, 2
          %v823 = vadd.f32 %v821, %v822
          %v824 = vrot.slane %v823, 1
          %v825 = vadd.f32 %v823, %v824
          %v826 = vsel %vm356, %v782, 0.0
          %v827 = vrot.slane %v826, 4
          %v828 = vadd.f32 %v826, %v827
          %v829 = vrot.slane %v828, 2
          %v830 = vadd.f32 %v828, %v829
          %v831 = vrot.slane %v830, 1
          %v832 = vadd.f32 %v830, %v831
          %v833 = vsel %vm356, %v783, 0.0
          %v834 = vrot.slane %v833, 4
          %v835 = vadd.f32 %v833, %v834
          %v836 = vrot.slane %v835, 2
          %v837 = vadd.f32 %v835, %v836
          %v838 = vrot.slane %v837, 1
          %v839 = vadd.f32 %v837, %v838
          %v848 = vsel %vm520, %v797, %v790
          %v849 = vsel %vm522, %v804, %v848
          %v850 = vsel %vm524, %v811, %v849
          %v851 = vsel %vm526, %v818, %v850
          %v852 = vsel %vm528, %v825, %v851
          %v853 = vsel %vm530, %v832, %v852
          %v854 = vsel %vm532, %v839, %v853
          %856 = vst.msk [vmem:[#allocation2] sm:$0xff] %vm356, %v854
        $region52: #{tpu_custom_call.1} parent=39 // pred_fallthru
          _
        %v857 = vld [vmem:[#allocation2] sm:$0xff]
        %v858 = vld [vmem:[%s281] sm:$0xff]
        %v859 = vld [vmem:[%s281 + $0x8] sm:$0xff]
        %v860 = vld [vmem:[%s281 + $0x10] sm:$0xff]
        %v861 = vld [vmem:[%s281 + $0x18] sm:$0xff]
        %v862 = vld [vmem:[%s281 + $0x20] sm:$0xff]
        %v863 = vld [vmem:[%s281 + $0x28] sm:$0xff]
        %v864 = vld [vmem:[%s281 + $0x30] sm:$0xff]
        %v865 = vld [vmem:[%s281 + $0x38] sm:$0xff]
        %v866 = vld [vmem:[%s327] sm:$0x1]
        %v868 = vlaneseq
        %v869 = vshrl.u32 %v868, 7
        %v870 = vsub.s32 0, %v869
        %v871 = vrot.slane %v866, %v870
        %vm873 = vcmask 523264
        %v875 = vsel %vm873, %v857, 0
        %877 = vmatprep.subr.mxu0 0.0
        %878 = vmatpush1.msra.mxu0 %v858
        %879 = vmatprep.subr.mxu0 0.0
        %880 = vmatpush1.msra.mxu0 %v859
        %881 = vmatprep.subr.mxu0 0.0
        %882 = vmatpush1.msra.mxu0 %v860
        %883 = vmatprep.subr.mxu0 0.0
        %884 = vmatpush1.msra.mxu0 %v861
        %885 = vmatprep.subr.mxu0 0.0
        %886 = vmatpush1.msra.mxu0 %v862
        %887 = vmatprep.subr.mxu0 0.0
        %888 = vmatpush1.msra.mxu0 %v863
        %889 = vmatprep.subr.mxu0 0.0
        %890 = vmatpush1.msra.mxu0 %v864
        %891 = vmatprep.subr.mxu0 0.0
        %892 = vmatpush1.msra.mxu0 %v865
        %893 = vmatprep.subr.mxu0 0.0
        %894 = vmatpush1.msra.mxu0 0.0
        %895 = vmatprep.subr.mxu0 0.0
        %896 = vmatpush1.msra.mxu0 0.0
        %897 = vmatprep.subr.mxu0 0.0
        %898 = vmatpush1.msra.mxu0 0.0
        %899 = vmatprep.subr.mxu0 0.0
        %900 = vmatpush1.msra.mxu0 0.0
        %901 = vmatprep.subr.mxu0 0.0
        %902 = vmatpush1.msra.mxu0 0.0
        %903 = vmatprep.subr.mxu0 0.0
        %904 = vmatpush1.msra.mxu0 0.0
        %905 = vmatprep.subr.mxu0 0.0
        %906 = vmatpush1.msra.mxu0 0.0
        %907 = vmatprep.subr.mxu0 0.0
        %908 = vmatpush1.msra.mxu0 0.0
        %909 = vmatprep.subr.mxu0 0.0
        %910 = vmatpush1.msra.mxu0 0.0
        %911 = vmatprep.subr.mxu0 0.0
        %912 = vmatpush1.msra.mxu0 0.0
        %913 = vmatprep.subr.mxu0 0.0
        %914 = vmatpush1.msra.mxu0 0.0
        %915 = vmatprep.subr.mxu0 0.0
        %916 = vmatpush1.msra.mxu0 0.0
        %917 = vmatprep.subr.mxu0 0.0
        %918 = vmatpush1.msra.mxu0 0.0
        %919 = vmatprep.subr.mxu0 0.0
        %920 = vmatpush1.msra.mxu0 0.0
        %921 = vmatprep.subr.mxu0 0.0
        %922 = vmatpush1.msra.mxu0 0.0
        %923 = vmatprep.subr.mxu0 0.0
        %924 = vmatpush1.msra.mxu0 0.0
        %925 = vmatprep.subr.mxu0 0.0
        %926 = vmatpush1.msra.mxu0 0.0
        %927 = vmatprep.subr.mxu0 0.0
        %928 = vmatpush1.msra.mxu0 0.0
        %929 = vmatprep.subr.mxu0 0.0
        %930 = vmatpush1.msra.mxu0 0.0
        %931 = vmatprep.subr.mxu0 0.0
        %932 = vmatpush1.msra.mxu0 0.0
        %933 = vmatprep.subr.mxu0 0.0
        %934 = vmatpush1.msra.mxu0 0.0
        %935 = vmatprep.subr.mxu0 0.0
        %936 = vmatpush1.msra.mxu0 0.0
        %937 = vmatprep.subr.mxu0 0.0
        %938 = vmatpush1.msra.mxu0 0.0
        %939 = vmatprep.subr.mxu0 0.0
        %940 = vmatpush1.msra.mxu0 0.0
        %941 = vmatprep.mubr.f32.mxu0 0.0
        %942 = vmatmul.mubr.f32.gmra.mrb[0].mxu0 %v875
        %v943 = vpop.f32.mrb[0].mxu0
        %v944 = vadd.f32 %v871, %v943
        %v945 = vpop.f32.mrb[0].mxu0
        %946 = vdwg.mxu0
        %947 = vst [vmem:[%s319] sm:$0xff] %v944
        %s948 = sand.u32 %s172, 1
        %s949 = scalar_lea.sflag [#allocation5], %s948
        %s950 = sand.u32 %s172, 1
        %s951 = smul.addr %s950, 8
        %s952 = scalar_lea.vmem [#allocation8], %s951
        // Predicated region
        $region53: #{tpu_custom_call.1} parent=39 // pred_check
          %p953 = pneg %p182
        $region54: #{tpu_custom_call.1} parent=39 // pred_check_branch
          %955 = sbr.rel (%p953) target = $region56
        $region55: #{tpu_custom_call.1} parent=39 // pred_region
          %s957 = ssub.s32 128, 128
          %958 = vsyncadd %s949, %s957
          %s959 = smul.addr %s29, 2
          %s960 = sadd.s32 %s30, %s959
          %s961 = smul.addr %s960, 128
          %s962 = scalar_lea.hbm %s5, %s961
          %s964 = sshll.u32 %s952, 4
          %s965 = int_to_ptr.vmem [resolvable:$true] %s964
          %967 = dma.vmem_to_hbm [thread:$0]  %s965, 128, %s962, %s949
        $region56: #{tpu_custom_call.1} parent=39 // pred_fallthru
          _
      $region40: #{tpu_custom_call.1} parent=5 // pred_fallthru
        _
      %p968 = scmp.le.s32.totalorder 2, %s20
      // Predicated region
      $region57: #{tpu_custom_call.1} parent=5 // pred_check
        %p969 = pneg %p968
      $region58: #{tpu_custom_call.1} parent=5 // pred_check_branch
        %971 = sbr.rel (%p969) target = $region60
      $region59: #{tpu_custom_call.1} parent=5 // pred_region
        %s972 = ssub.s32 %s20, 2
        // Predicated region
        $region61: #{tpu_custom_call.1} parent=59 // pred_check
          %p973 = pneg %p188
        $region62: #{tpu_custom_call.1} parent=59 // pred_check_branch
          %975 = sbr.rel (%p973) target = $region64
        $region63: #{tpu_custom_call.1} parent=59 // pred_region
          %s976 = sand.u32 %s173, 1
          %s977 = scalar_lea.sflag [#allocation5], %s976
          %s978 = sand.u32 %s173, 1
          %s979 = smul.addr %s978, 8
          %s980 = scalar_lea.vmem [#allocation8], %s979
          %981 = dma.done %s977, 128
        $region64: #{tpu_custom_call.1} parent=59 // pred_fallthru
          _
      $region60: #{tpu_custom_call.1} parent=5 // pred_fallthru
        _
    $region6: #{tpu_custom_call.1} parent=1 // loop_footer
      %s24 = sadd.s32 1, %s20
    $region7: #{tpu_custom_call.1} parent=1 // loop_footer_branch
      %19 = sbr.rel target = $region3
    $region8: #{tpu_custom_call.1} parent=1 // loop_exit
      _
    %982 = vsyncpa [#allocation4], 1
    %s983 = scalar_lea.sflag [#allocation4], 1
    %984 = vsyncpa %s983, 1
    %985 = vsyncpa [#allocation7], 1
    %s986 = scalar_lea.sflag [#allocation7], 1
    %987 = vsyncpa %s986, 1
    %988 = vsyncpa [#allocation5], 1
    %s989 = scalar_lea.sflag [#allocation5], 1
    %990 = vsyncpa %s989, 1

// kernel: tpu_custom_call.1
$region0: #{tpu_custom_call.1}
  #allocation0 [shape = 'u32[]', space=smem, size = 0x4, offset = 0x4, fixed_abs, tag = 'smem constant byte address 0x4 - core index']
  #allocation1 [shape = 'u32[144,128]{1,0:T(1,128)}', space=vmem, size = 0x12000, scoped, tag = 'internal scratch']
  #allocation2 [shape = 'f32[8,64]{1,0:T(8,128)}', space=vmem, size = 0x1000, scoped, tag = 'scratch operand']
  %s0 = inlined_call_operand.hbm [shape: f32[16,8,64], index: 0, kind: input, shape index: {}]
  %s1 = inlined_call_operand.vmem [shape: f32[16,8], index: 1, kind: input, shape index: {}]
  %s2 = inlined_call_operand.vmem [shape: f32[1,64], index: 2, kind: input, shape index: {}]
  %s3 = inlined_call_operand.hbm [shape: f32[64,256], index: 3, kind: input, shape index: {}]
  %s4 = inlined_call_operand.vmem [shape: f32[1,256], index: 4, kind: input, shape index: {}]
  %s5 = inlined_call_operand.hbm [shape: f32[16,256], index: 5, kind: output, shape index: {}]
  %s6 = sld [smem:[#allocation0]]
  $region65: #{tpu_custom_call.1} parent=0
    _
  %s8 = ssub.s32 1, %s6
  %s9 = scalar_select 0, %s8, %s6
  $region1: #{tpu_custom_call.1} parent=0
    #allocation3 [shape = 'u8[65536]{0}', space=vmem, size = 0x10000, scoped, tag = 'input window, operand 0']
    #allocation4 [shape = 's32[2]{0}', space=sflag, size = 0x8, scoped, tag = 'scoped memory for tpu_custom_call.1']
    #allocation5 [shape = 's32[2]{0}', space=sflag, size = 0x8, scoped, tag = 'scoped memory for tpu_custom_call.1']
    #allocation6 [shape = 'u8[65536]{0}', space=vmem, size = 0x10000, scoped, tag = 'input window, operand 3']
    #allocation7 [shape = 's32[2]{0}', space=sflag, size = 0x8, scoped, tag = 'scoped memory for tpu_custom_call.1']
    #allocation8 [shape = 'u8[8192]{0}', space=vmem, size = 0x2000, scoped, tag = 'output window, operand 0']
    %10 = vsyncpa [#allocation4], 0
    %s11 = scalar_lea.sflag [#allocation4], 1
    %12 = vsyncpa %s11, 0
    %13 = vsyncpa [#allocation7], 0
    %s14 = scalar_lea.sflag [#allocation7], 1
    %15 = vsyncpa %s14, 0
    %16 = vsyncpa [#allocation5], 0
    %s17 = scalar_lea.sflag [#allocation5], 1
    %18 = vsyncpa %s17, 0
    loop: start=0, step=1, limit=6
    $region2: #{tpu_custom_call.1} parent=1 // loop_pre_header
      _
    $region3: #{tpu_custom_call.1} parent=1 // loop_header
      %s20 = sphi 0, %s24
      %p21 = scmp.ge.s32.totalorder %s20, 6
      %s27 = sphi 0, %s39
      %s28 = sphi 0, %s35
      %s29 = sphi 0, %s27
      %s30 = sphi 0, %s28
      %s31 = sphi 0, %s29
      %s32 = sphi 0, %s30
      %s42 = sphi 0, %s44
      %s45 = sphi 0, %s42
      %s46 = sphi 0, %s45
      %s62 = sphi 0, %s46
      %s68 = sphi 0, %s70
      %s71 = sphi 0, %s68
      %s72 = sphi 0, %s71
      %s88 = sphi 0, %s72
      %s92 = sphi 0, %s92
      %s94 = sphi 0, %s92
      %s95 = sphi 0, %s94
      %s109 = sphi 0, %s95
      %s115 = sphi 0, %s117
      %s118 = sphi 0, %s115
      %s119 = sphi 0, %s118
      %s135 = sphi 0, %s119
      %s141 = sphi 0, %s143
      %s144 = sphi 0, %s141
      %s145 = sphi 0, %s144
      %s161 = sphi 0, %s145
      %s169 = sphi 0, %s171
      %s172 = sphi 0, %s169
      %s173 = sphi 0, %s172
      %s189 = sphi 0, %s173
    $region4: #{tpu_custom_call.1} parent=1 // loop_header_branch
      %23 = sbr.rel (%p21) target = $region8
    $region5: #{tpu_custom_call.1} parent=1 // loop_body
      %s25 = ssub.s32 %s20, 1
      %s26 = ssub.s32 %s20, 2
      %s33 = sadd.s32 1, %s28
      %p34 = scmp.ge.s32.totalorder %s33, 2
      %s35 = scalar_select %p34, 0, %s33
      %s36 = sadd.s32 1, %s27
      %s37 = scalar_select %p34, %s36, %s27
      %p38 = scmp.ge.s32.totalorder %s37, 2
      %s39 = scalar_select %p38, 0, %s37
      %s40 = ssub.s32 %s27, %s39
      %p41 = scmp.eq.s32.totalorder %s40, 0
      %s43 = sadd.s32 %s42, 1
      %s44 = scalar_select %p41, %s42, %s43
      %p47 = pneg %p41
      %p48 = scmp.eq.s32.totalorder %s20, 3
      %p49 = por %p47, %p48
      %p50 = scmp.ne.s32.totalorder %s42, %s45
      %p51 = scmp.eq.s32.totalorder %s20, 0
      %p52 = por %p50, %p51
      %p53 = scmp.ne.s32.totalorder %s42, %s45
      %p54 = scmp.eq.s32.totalorder %s25, 3
      %p55 = por %p53, %p54
      %p56 = scmp.ne.s32.totalorder %s45, %s46
      %p57 = scmp.eq.s32.totalorder %s25, 0
      %p58 = por %p56, %p57
      %p59 = scmp.ne.s32.totalorder %s45, %s46
      %p60 = scmp.eq.s32.totalorder %s26, 3
      %p61 = por %p59, %p60
      %p63 = scmp.ne.s32.totalorder %s46, %s62
      %p64 = scmp.eq.s32.totalorder %s26, 0
      %p65 = por %p63, %p64
      %s66 = ssub.s32 %s27, %s39
      %p67 = scmp.eq.s32.totalorder %s66, 0
      %s69 = sadd.s32 %s68, 1
      %s70 = scalar_select %p67, %s68, %s69
      %p73 = pneg %p67
      %p74 = scmp.eq.s32.totalorder %s20, 3
      %p75 = por %p73, %p74
      %p76 = scmp.ne.s32.totalorder %s68, %s71
      %p77 = scmp.eq.s32.totalorder %s20, 0
      %p78 = por %p76, %p77
      %p79 = scmp.ne.s32.totalorder %s68, %s71
      %p80 = scmp.eq.s32.totalorder %s25, 3
      %p81 = por %p79, %p80
      %p82 = scmp.ne.s32.totalorder %s71, %s72
      %p83 = scmp.eq.s32.totalorder %s25, 0
      %p84 = por %p82, %p83
      %p85 = scmp.ne.s32.totalorder %s71, %s72
      %p86 = scmp.eq.s32.totalorder %s26, 3
      %p87 = por %p85, %p86
      %p89 = scmp.ne.s32.totalorder %s72, %s88
      %p90 = scmp.eq.s32.totalorder %s26, 0
      %p91 = por %p89, %p90
      %s93 = sadd.s32 %s92, 1
      %p96 = scmp.eq.s32.totalorder %s20, 3
      %p97 = scmp.ne.s32.totalorder %s92, %s94
      %p98 = scmp.eq.s32.totalorder %s20, 0
      %p99 = por %p97, %p98
      %p100 = scmp.ne.s32.totalorder %s92, %s94
      %p101 = scmp.eq.s32.totalorder %s25, 3
      %p102 = por %p100, %p101
      %p103 = scmp.ne.s32.totalorder %s94, %s95
      %p104 = scmp.eq.s32.totalorder %s25, 0
      %p105 = por %p103, %p104
      %p106 = scmp.ne.s32.totalorder %s94, %s95
      %p107 = scmp.eq.s32.totalorder %s26, 3
      %p108 = por %p106, %p107
      %p110 = scmp.ne.s32.totalorder %s95, %s109
      %p111 = scmp.eq.s32.totalorder %s26, 0
      %p112 = por %p110, %p111
      %s113 = ssub.s32 %s28, %s35
      %p114 = scmp.eq.s32.totalorder %s113, 0
      %s116 = sadd.s32 %s115, 1
      %s117 = scalar_select %p114, %s115, %s116
      %p120 = pneg %p114
      %p121 = scmp.eq.s32.totalorder %s20, 3
      %p122 = por %p120, %p121
      %p123 = scmp.ne.s32.totalorder %s115, %s118
      %p124 = scmp.eq.s32.totalorder %s20, 0
      %p125 = por %p123, %p124
      %p126 = scmp.ne.s32.totalorder %s115, %s118
      %p127 = scmp.eq.s32.totalorder %s25, 3
      %p128 = por %p126, %p127
      %p129 = scmp.ne.s32.totalorder %s118, %s119
      %p130 = scmp.eq.s32.totalorder %s25, 0
      %p131 = por %p129, %p130
      %p132 = scmp.ne.s32.totalorder %s118, %s119
      %p133 = scmp.eq.s32.totalorder %s26, 3
      %p134 = por %p132, %p133
      %p136 = scmp.ne.s32.totalorder %s119, %s135
      %p137 = scmp.eq.s32.totalorder %s26, 0
      %p138 = por %p136, %p137
      %s139 = ssub.s32 %s28, %s35
      %p140 = scmp.eq.s32.totalorder %s139, 0
      %s142 = sadd.s32 %s141, 1
      %s143 = scalar_select %p140, %s141, %s142
      %p146 = pneg %p140
      %p147 = scmp.eq.s32.totalorder %s20, 3
      %p148 = por %p146, %p147
      %p149 = scmp.ne.s32.totalorder %s141, %s144
      %p150 = scmp.eq.s32.totalorder %s20, 0
      %p151 = por %p149, %p150
      %p152 = scmp.ne.s32.totalorder %s141, %s144
      %p153 = scmp.eq.s32.totalorder %s25, 3
      %p154 = por %p152, %p153
      %p155 = scmp.ne.s32.totalorder %s144, %s145
      %p156 = scmp.eq.s32.totalorder %s25, 0
      %p157 = por %p155, %p156
      %p158 = scmp.ne.s32.totalorder %s144, %s145
      %p159 = scmp.eq.s32.totalorder %s26, 3
      %p160 = por %p158, %p159
      %p162 = scmp.ne.s32.totalorder %s145, %s161
      %p163 = scmp.eq.s32.totalorder %s26, 0
      %p164 = por %p162, %p163
      %s165 = ssub.s32 %s27, %s39
      %s166 = ssub.s32 %s28, %s35
      %s167 = sor.u32 %s165, %s166
      %p168 = scmp.eq.s32.totalorder %s167, 0
      %s170 = sadd.s32 %s169, 1
      %s171 = scalar_select %p168, %s169, %s170
      %p174 = pneg %p168
      %p175 = scmp.eq.s32.totalorder %s20, 3
      %p176 = por %p174, %p175
      %p177 = scmp.ne.s32.totalorder %s169, %s172
      %p178 = scmp.eq.s32.totalorder %s20, 0
      %p179 = por %p177, %p178
      %p180 = scmp.ne.s32.totalorder %s169, %s172
      %p181 = scmp.eq.s32.totalorder %s25, 3
      %p182 = por %p180, %p181
      %p183 = scmp.ne.s32.totalorder %s172, %s173
      %p184 = scmp.eq.s32.totalorder %s25, 0
      %p185 = por %p183, %p184
      %p186 = scmp.ne.s32.totalorder %s172, %s173
      %p187 = scmp.eq.s32.totalorder %s26, 3
      %p188 = por %p186, %p187
      %p190 = scmp.ne.s32.totalorder %s173, %s189
      %p191 = scmp.eq.s32.totalorder %s26, 0
      %p192 = por %p190, %p191
      %p193 = scmp.le.s32.totalorder 1, %s20
      %p194 = scmp.lt.s32.totalorder %s20, 5
      %p195 = pnand %p193, %p194
      %p196 = pneg %p195
      // Predicated region
      $region9: #{tpu_custom_call.1} parent=5 // pred_check
        _
      $region10: #{tpu_custom_call.1} parent=5 // pred_check_branch
        %198 = sbr.rel (%p195) target = $region12
      $region11: #{tpu_custom_call.1} parent=5 // pred_region
        %s199 = ssub.s32 %s20, 1
        // Predicated region
        $region13: #{tpu_custom_call.1} parent=11 // pred_check
          %p200 = pneg %p105
        $region14: #{tpu_custom_call.1} parent=11 // pred_check_branch
          %202 = sbr.rel (%p200) target = $region16
        $region15: #{tpu_custom_call.1} parent=11 // pred_region
          _
        $region16: #{tpu_custom_call.1} parent=11 // pred_fallthru
          _
      $region12: #{tpu_custom_call.1} parent=5 // pred_fallthru
        _
      %p203 = scmp.lt.s32.totalorder %s20, 4
      // Predicated region
      $region17: #{tpu_custom_call.1} parent=5 // pred_check
        %p204 = pneg %p203
      $region18: #{tpu_custom_call.1} parent=5 // pred_check_branch
        %206 = sbr.rel (%p204) target = $region20
      $region19: #{tpu_custom_call.1} parent=5 // pred_region
        // Predicated region
        $region21: #{tpu_custom_call.1} parent=19 // pred_check
          %p207 = pneg %p52
        $region22: #{tpu_custom_call.1} parent=19 // pred_check_branch
          %209 = sbr.rel (%p207) target = $region24
        $region23: #{tpu_custom_call.1} parent=19 // pred_region
          %s210 = sand.u32 %s42, 1
          %s211 = scalar_lea.sflag [#allocation4], %s210
          %s212 = sand.u32 %s42, 1
          %s213 = smul.addr %s212, 64
          %s214 = scalar_lea.vmem [#allocation3], %s213
          %s215 = smul.u32 8, %s27
          %s217 = ssub.s32 1024, 1024
          %218 = vsyncadd %s211, %s217
          %s219 = smul.addr %s215, 128
          %s220 = scalar_lea.hbm %s0, %s219
          %s221 = sshll.u32 %s214, 4
          %s222 = int_to_ptr.vmem [resolvable:$true] %s221
          %227 = dma.hbm_to_vmem [thread:$0]  %s220, 1024, %s222, %s211, 128, 128, 8
        $region24: #{tpu_custom_call.1} parent=19 // pred_fallthru
          _
        // Predicated region
        $region25: #{tpu_custom_call.1} parent=19 // pred_check
          %p228 = pneg %p78
        $region26: #{tpu_custom_call.1} parent=19 // pred_check_branch
          %230 = sbr.rel (%p228) target = $region28
        $region27: #{tpu_custom_call.1} parent=19 // pred_region
          %p231 = scmp.lt.s32.totalorder %s27, 1
          %s232 = scalar_select %p231, %s27, 1
          %s233 = smul.addr %s232, 8
          %s234 = scalar_lea.vmem %s1, %s233
        $region28: #{tpu_custom_call.1} parent=19 // pred_fallthru
          _
        // Predicated region
        $region29: #{tpu_custom_call.1} parent=19 // pred_check
          %p235 = pneg %p125
        $region30: #{tpu_custom_call.1} parent=19 // pred_check_branch
          %237 = sbr.rel (%p235) target = $region32
        $region31: #{tpu_custom_call.1} parent=19 // pred_region
          %s238 = sand.u32 %s115, 1
          %s239 = scalar_lea.sflag [#allocation7], %s238
          %s240 = sand.u32 %s115, 1
          %s241 = smul.addr %s240, 64
          %s242 = scalar_lea.vmem [#allocation6], %s241
          %s244 = ssub.s32 1024, 1024
          %245 = vsyncadd %s239, %s244
          %s246 = smul.addr %s28, 128
          %s247 = scalar_lea.hbm %s3, %s246
          %s248 = sshll.u32 %s242, 4
          %s249 = int_to_ptr.vmem [resolvable:$true] %s248
          %254 = dma.hbm_to_vmem [thread:$0]  %s247, 1024, %s249, %s239, 256, 128, 8
        $region32: #{tpu_custom_call.1} parent=19 // pred_fallthru
          _
        // Predicated region
        $region33: #{tpu_custom_call.1} parent=19 // pred_check
          %p255 = pneg %p151
        $region34: #{tpu_custom_call.1} parent=19 // pred_check_branch
          %257 = sbr.rel (%p255) target = $region36
        $region35: #{tpu_custom_call.1} parent=19 // pred_region
          %p258 = scmp.lt.s32.totalorder %s28, 1
          %s259 = scalar_select %p258, %s28, 1
          %s260 = scalar_lea.vmem %s4, %s259
        $region36: #{tpu_custom_call.1} parent=19 // pred_fallthru
          _
      $region20: #{tpu_custom_call.1} parent=5 // pred_fallthru
        _
      %p261 = scmp.le.s32.totalorder 1, %s20
      %p262 = scmp.lt.s32.totalorder %s20, 5
      %p263 = pnand %p261, %p262
      %p264 = pneg %p263
      // Predicated region
      $region37: #{tpu_custom_call.1} parent=5 // pred_check
        _
      $region38: #{tpu_custom_call.1} parent=5 // pred_check_branch
        %266 = sbr.rel (%p263) target = $region40
      $region39: #{tpu_custom_call.1} parent=5 // pred_region
        %s267 = ssub.s32 %s20, 1
        %s268 = sand.u32 %s45, 1
        %s269 = scalar_lea.sflag [#allocation4], %s268
        %s270 = sand.u32 %s45, 1
        %s271 = smul.addr %s270, 64
        %s272 = scalar_lea.vmem [#allocation3], %s271
        // Predicated region
        $region41: #{tpu_custom_call.1} parent=39 // pred_check
          %p273 = pneg %p58
        $region42: #{tpu_custom_call.1} parent=39 // pred_check_branch
          %275 = sbr.rel (%p273) target = $region44
        $region43: #{tpu_custom_call.1} parent=39 // pred_region
          %276 = dma.done %s269, 1024
        $region44: #{tpu_custom_call.1} parent=39 // pred_fallthru
          _
        %s277 = sand.u32 %s118, 1
        %s278 = scalar_lea.sflag [#allocation7], %s277
        %s279 = sand.u32 %s118, 1
        %s280 = smul.addr %s279, 64
        %s281 = scalar_lea.vmem [#allocation6], %s280
        // Predicated region
        $region45: #{tpu_custom_call.1} parent=39 // pred_check
          %p282 = pneg %p131
        $region46: #{tpu_custom_call.1} parent=39 // pred_check_branch
          %284 = sbr.rel (%p282) target = $region48
        $region47: #{tpu_custom_call.1} parent=39 // pred_region
          %285 = dma.done %s278, 1024
        $region48: #{tpu_custom_call.1} parent=39 // pred_fallthru
          _
        %s286 = sand.u32 %s45, 1
        %s287 = scalar_lea.sflag [#allocation4], %s286
        %s288 = sand.u32 %s45, 1
        %s289 = smul.addr %s288, 64
        %s290 = scalar_lea.vmem [#allocation3], %s289
        %p291 = pneg %p58
        %p292 = pneg %p55
        %p293 = scmp.lt.s32.totalorder %s29, 1
        %s294 = scalar_select %p293, %s29, 1
        %s295 = smul.addr %s294, 8
        %s296 = scalar_lea.vmem %s1, %s295
        %p297 = pneg %p84
        %p298 = pneg %p81
        %p299 = pneg %p105
        %p300 = pneg %p102
        %s301 = sand.u32 %s118, 1
        %s302 = scalar_lea.sflag [#allocation7], %s301
        %s303 = sand.u32 %s118, 1
        %s304 = smul.addr %s303, 64
        %s305 = scalar_lea.vmem [#allocation6], %s304
        %p306 = pneg %p131
        %p307 = pneg %p128
        %p308 = scmp.lt.s32.totalorder %s30, 1
        %s309 = scalar_select %p308, %s30, 1
        %s310 = scalar_lea.vmem %s4, %s309
        %p311 = pneg %p157
        %p312 = pneg %p154
        %p313 = pneg %p185
        %p314 = pneg %p182
        %s315 = sand.u32 %s172, 1
        %s316 = scalar_lea.sflag [#allocation5], %s315
        %s317 = sand.u32 %s172, 1
        %s318 = smul.addr %s317, 8
        %s319 = scalar_lea.vmem [#allocation8], %s318
        %s320 = smul.u32 8, %s29
        %p321 = scmp.lt.s32.totalorder %s29, 1
        %s322 = scalar_select %p321, %s29, 1
        %s323 = smul.addr %s322, 8
        %s324 = scalar_lea.vmem %s1, %s323
        %p325 = scmp.lt.s32.totalorder %s30, 1
        %s326 = scalar_select %p325, %s30, 1
        %s327 = scalar_lea.vmem %s4, %s326
        %p328 = scmp.eq.s32.totalorder %s30, 0
        // Predicated region
        $region49: #{tpu_custom_call.1} parent=39 // pred_check
          %p329 = pneg %p328
        $region50: #{tpu_custom_call.1} parent=39 // pred_check_branch
          %331 = sbr.rel (%p329) target = $region52
        $region51: #{tpu_custom_call.1} parent=39 // pred_region
          %v332 = vld [vmem:[%s272] sm:$0xff]
          %v333 = vld [vmem:[%s272 + $0x8] sm:$0xff]
          %v334 = vld [vmem:[%s272 + $0x10] sm:$0xff]
          %v335 = vld [vmem:[%s272 + $0x18] sm:$0xff]
          %v336 = vld [vmem:[%s272 + $0x20] sm:$0xff]
          %v337 = vld [vmem:[%s272 + $0x28] sm:$0xff]
          %v338 = vld [vmem:[%s272 + $0x30] sm:$0xff]
          %v339 = vld [vmem:[%s272 + $0x38] sm:$0xff]
          %v340 = vld [vmem:[%s2] sm:$0x1]
          %v341 = vld [vmem:[%s324] sm:$0xff]
          %v343 = vlaneseq
          %v344 = vshrl.u32 %v343, 7
          %v345 = vsub.s32 0, %v344
          %v346 = vrot.slane %v340, %v345
          %v348 = vmul.f32 %v332, %v346
          %v349 = vmul.f32 %v333, %v346
          %v350 = vmul.f32 %v334, %v346
          %v351 = vmul.f32 %v335, %v346
          %v352 = vmul.f32 %v336, %v346
          %v353 = vmul.f32 %v337, %v346
          %v354 = vmul.f32 %v338, %v346
          %v355 = vmul.f32 %v339, %v346
          %vm356 = vcmask 523264
          %v357 = vsel %vm356, %v348, 0.0
          %358 = vadd.xlane.f32.xlu0 %v357
          %v359 = vpop.xlane.xlu0 %358
          %v360 = vsel %vm356, %v349, 0.0
          %361 = vadd.xlane.f32.xlu0 %v360
          %v362 = vpop.xlane.xlu0 %361
          %v363 = vsel %vm356, %v350, 0.0
          %364 = vadd.xlane.f32.xlu0 %v363
          %v365 = vpop.xlane.xlu0 %364
          %v366 = vsel %vm356, %v351, 0.0
          %367 = vadd.xlane.f32.xlu0 %v366
          %v368 = vpop.xlane.xlu0 %367
          %v369 = vsel %vm356, %v352, 0.0
          %370 = vadd.xlane.f32.xlu0 %v369
          %v371 = vpop.xlane.xlu0 %370
          %v372 = vsel %vm356, %v353, 0.0
          %373 = vadd.xlane.f32.xlu0 %v372
          %v374 = vpop.xlane.xlu0 %373
          %v375 = vsel %vm356, %v354, 0.0
          %376 = vadd.xlane.f32.xlu0 %v375
          %v377 = vpop.xlane.xlu0 %376
          %v378 = vsel %vm356, %v355, 0.0
          %379 = vadd.xlane.f32.xlu0 %v378
          %v380 = vpop.xlane.xlu0 %379
          %v382 = vlaneseq
          %v383 = vshrl.u32 %v382, 7
          %v384 = vsub.s32 0, %v383
          %v385 = vrot.slane %v341, %v384
          %387 = vbcast.lane.b32.xlu0 %v385, 256
          %v388 = vpop.permute.xlu0 %387
          %v389 = vlaneseq
          %v390 = vshrl.u32 %v389, 7
          %v391 = vsub.s32 1, %v390
          %v392 = vrot.slane %v341, %v391
          %394 = vbcast.lane.b32.xlu0 %v392, 256
          %v395 = vpop.permute.xlu0 %394
          %v396 = vlaneseq
          %v397 = vshrl.u32 %v396, 7
          %v398 = vsub.s32 2, %v397
          %v399 = vrot.slane %v341, %v398
          %401 = vbcast.lane.b32.xlu0 %v399, 256
          %v402 = vpop.permute.xlu0 %401
          %v403 = vlaneseq
          %v404 = vshrl.u32 %v403, 7
          %v405 = vsub.s32 3, %v404
          %v406 = vrot.slane %v341, %v405
          %408 = vbcast.lane.b32.xlu0 %v406, 256
          %v409 = vpop.permute.xlu0 %408
          %v410 = vlaneseq
          %v411 = vshrl.u32 %v410, 7
          %v412 = vsub.s32 4, %v411
          %v413 = vrot.slane %v341, %v412
          %415 = vbcast.lane.b32.xlu0 %v413, 256
          %v416 = vpop.permute.xlu0 %415
          %v417 = vlaneseq
          %v418 = vshrl.u32 %v417, 7
          %v419 = vsub.s32 5, %v418
          %v420 = vrot.slane %v341, %v419
          %422 = vbcast.lane.b32.xlu0 %v420, 256
          %v423 = vpop.permute.xlu0 %422
          %v424 = vlaneseq
          %v425 = vshrl.u32 %v424, 7
          %v426 = vsub.s32 6, %v425
          %v427 = vrot.slane %v341, %v426
          %429 = vbcast.lane.b32.xlu0 %v427, 256
          %v430 = vpop.permute.xlu0 %429
          %v431 = vlaneseq
          %v432 = vshrl.u32 %v431, 7
          %v433 = vsub.s32 7, %v432
          %v434 = vrot.slane %v341, %v433
          %436 = vbcast.lane.b32.xlu0 %v434, 256
          %v437 = vpop.permute.xlu0 %436
          %v446 = vadd.f32 %v359, %v388
          %v447 = vadd.f32 %v362, %v395
          %v448 = vadd.f32 %v365, %v402
          %v449 = vadd.f32 %v368, %v409
          %v450 = vadd.f32 %v371, %v416
          %v451 = vadd.f32 %v374, %v423
          %v452 = vadd.f32 %v377, %v430
          %v453 = vadd.f32 %v380, %v437
          %462 = vset.pattern.permute.xlu0 0
          %463 = vperm.xlu0 %462, %v446
          %v464 = vpop.permute.xlu0 %463
          %465 = vset.pattern.permute.xlu0 0
          %466 = vperm.xlu0 %465, %v447
          %v467 = vpop.permute.xlu0 %466
          %468 = vset.pattern.permute.xlu0 0
          %469 = vperm.xlu0 %468, %v448
          %v470 = vpop.permute.xlu0 %469
          %471 = vset.pattern.permute.xlu0 0
          %472 = vperm.xlu0 %471, %v449
          %v473 = vpop.permute.xlu0 %472
          %474 = vset.pattern.permute.xlu0 0
          %475 = vperm.xlu0 %474, %v450
          %v476 = vpop.permute.xlu0 %475
          %477 = vset.pattern.permute.xlu0 0
          %478 = vperm.xlu0 %477, %v451
          %v479 = vpop.permute.xlu0 %478
          %480 = vset.pattern.permute.xlu0 0
          %481 = vperm.xlu0 %480, %v452
          %v482 = vpop.permute.xlu0 %481
          %483 = vset.pattern.permute.xlu0 0
          %484 = vperm.xlu0 %483, %v453
          %v485 = vpop.permute.xlu0 %484
          %v486 = vlaneseq
          %v487 = vand.u32 %v486, 127
          %v488 = vlaneseq
          %v489 = vshrl.u32 %v488, 7
          %v490 = vsub.s32 %v487, %v489
          %v491 = vrot.slane %v464, %v490
          %v492 = vlaneseq
          %v493 = vshrl.u32 %v492, 7
          %v494 = vsub.s32 %v487, %v493
          %v495 = vrot.slane %v467, %v494
          %v496 = vlaneseq
          %v497 = vshrl.u32 %v496, 7
          %v498 = vsub.s32 %v487, %v497
          %v499 = vrot.slane %v470, %v498
          %v500 = vlaneseq
          %v501 = vshrl.u32 %v500, 7
          %v502 = vsub.s32 %v487, %v501
          %v503 = vrot.slane %v473, %v502
          %v504 = vlaneseq
          %v505 = vshrl.u32 %v504, 7
          %v506 = vsub.s32 %v487, %v505
          %v507 = vrot.slane %v476, %v506
          %v508 = vlaneseq
          %v509 = vshrl.u32 %v508, 7
          %v510 = vsub.s32 %v487, %v509
          %v511 = vrot.slane %v479, %v510
          %v512 = vlaneseq
          %v513 = vshrl.u32 %v512, 7
          %v514 = vsub.s32 %v487, %v513
          %v515 = vrot.slane %v482, %v514
          %v516 = vlaneseq
          %v517 = vshrl.u32 %v516, 7
          %v518 = vsub.s32 %v487, %v517
          %v519 = vrot.slane %v485, %v518
          %vm520 = vcmask 1041409
          %v521 = vsel %vm520, %v495, %v491
          %vm522 = vcmask 1042434
          %v523 = vsel %vm522, %v499, %v521
          %vm524 = vcmask 1043459
          %v525 = vsel %vm524, %v503, %v523
          %vm526 = vcmask 1044484
          %v527 = vsel %vm526, %v507, %v525
          %vm528 = vcmask 1045509
          %v529 = vsel %vm528, %v511, %v527
          %vm530 = vcmask 1046534
          %v531 = vsel %vm530, %v515, %v529
          %vm532 = vcmask 1047559
          %v533 = vsel %vm532, %v519, %v531
          %vm535 = vcmask 64512
          %v536 = vsel %vm535, %v533, -inf
          %537 = vmax.xlane.f32.xlu0 %v536
          %v538 = vpop.xlane.xlu0 %537
          %v540 = vlaneseq
          %v541 = vshrl.u32 %v540, 7
          %v542 = vsub.s32 0, %v541
          %v543 = vrot.slane %v538, %v542
          %v544 = vlaneseq
          %v545 = vshrl.u32 %v544, 7
          %v546 = vsub.s32 1, %v545
          %v547 = vrot.slane %v538, %v546
          %v548 = vlaneseq
          %v549 = vshrl.u32 %v548, 7
          %v550 = vsub.s32 2, %v549
          %v551 = vrot.slane %v538, %v550
          %v552 = vlaneseq
          %v553 = vshrl.u32 %v552, 7
          %v554 = vsub.s32 3, %v553
          %v555 = vrot.slane %v538, %v554
          %v556 = vlaneseq
          %v557 = vshrl.u32 %v556, 7
          %v558 = vsub.s32 4, %v557
          %v559 = vrot.slane %v538, %v558
          %v560 = vlaneseq
          %v561 = vshrl.u32 %v560, 7
          %v562 = vsub.s32 5, %v561
          %v563 = vrot.slane %v538, %v562
          %v564 = vlaneseq
          %v565 = vshrl.u32 %v564, 7
          %v566 = vsub.s32 6, %v565
          %v567 = vrot.slane %v538, %v566
          %v568 = vlaneseq
          %v569 = vshrl.u32 %v568, 7
          %v570 = vsub.s32 7, %v569
          %v571 = vrot.slane %v538, %v570
          %v580 = vsub.f32 %v446, %v543
          %v581 = vsub.f32 %v447, %v547
          %v582 = vsub.f32 %v448, %v551
          %v583 = vsub.f32 %v449, %v555
          %v584 = vsub.f32 %v450, %v559
          %v585 = vsub.f32 %v451, %v563
          %v586 = vsub.f32 %v452, %v567
          %v587 = vsub.f32 %v453, %v571
          %v588 = vmul.f32 %v580, 1.442695
          %v589 = vpow.pop %v588
          %v590 = vmul.f32 %v581, 1.442695
          %v591 = vpow.pop %v590
          %v592 = vmul.f32 %v582, 1.442695
          %v593 = vpow.pop %v592
          %v594 = vmul.f32 %v583, 1.442695
          %v595 = vpow.pop %v594
          %v596 = vmul.f32 %v584, 1.442695
          %v597 = vpow.pop %v596
          %v598 = vmul.f32 %v585, 1.442695
          %v599 = vpow.pop %v598
          %v600 = vmul.f32 %v586, 1.442695
          %v601 = vpow.pop %v600
          %v602 = vmul.f32 %v587, 1.442695
          %v603 = vpow.pop %v602
          %612 = vset.pattern.permute.xlu0 0
          %613 = vperm.xlu0 %612, %v589
          %v614 = vpop.permute.xlu0 %613
          %615 = vset.pattern.permute.xlu0 0
          %616 = vperm.xlu0 %615, %v591
          %v617 = vpop.permute.xlu0 %616
          %618 = vset.pattern.permute.xlu0 0
          %619 = vperm.xlu0 %618, %v593
          %v620 = vpop.permute.xlu0 %619
          %621 = vset.pattern.permute.xlu0 0
          %622 = vperm.xlu0 %621, %v595
          %v623 = vpop.permute.xlu0 %622
          %624 = vset.pattern.permute.xlu0 0
          %625 = vperm.xlu0 %624, %v597
          %v626 = vpop.permute.xlu0 %625
          %627 = vset.pattern.permute.xlu0 0
          %628 = vperm.xlu0 %627, %v599
          %v629 = vpop.permute.xlu0 %628
          %630 = vset.pattern.permute.xlu0 0
          %631 = vperm.xlu0 %630, %v601
          %v632 = vpop.permute.xlu0 %631
          %633 = vset.pattern.permute.xlu0 0
          %634 = vperm.xlu0 %633, %v603
          %v635 = vpop.permute.xlu0 %634
          %v636 = vlaneseq
          %v637 = vshrl.u32 %v636, 7
          %v638 = vsub.s32 %v487, %v637
          %v639 = vrot.slane %v614, %v638
          %v640 = vlaneseq
          %v641 = vshrl.u32 %v640, 7
          %v642 = vsub.s32 %v487, %v641
          %v643 = vrot.slane %v617, %v642
          %v644 = vlaneseq
          %v645 = vshrl.u32 %v644, 7
          %v646 = vsub.s32 %v487, %v645
          %v647 = vrot.slane %v620, %v646
          %v648 = vlaneseq
          %v649 = vshrl.u32 %v648, 7
          %v650 = vsub.s32 %v487, %v649
          %v651 = vrot.slane %v623, %v650
          %v652 = vlaneseq
          %v653 = vshrl.u32 %v652, 7
          %v654 = vsub.s32 %v487, %v653
          %v655 = vrot.slane %v626, %v654
          %v656 = vlaneseq
          %v657 = vshrl.u32 %v656, 7
          %v658 = vsub.s32 %v487, %v657
          %v659 = vrot.slane %v629, %v658
          %v660 = vlaneseq
          %v661 = vshrl.u32 %v660, 7
          %v662 = vsub.s32 %v487, %v661
          %v663 = vrot.slane %v632, %v662
          %v664 = vlaneseq
          %v665 = vshrl.u32 %v664, 7
          %v666 = vsub.s32 %v487, %v665
          %v667 = vrot.slane %v635, %v666
          %v668 = vsel %vm520, %v643, %v639
          %v669 = vsel %vm522, %v647, %v668
          %v670 = vsel %vm524, %v651, %v669
          %v671 = vsel %vm526, %v655, %v670
          %v672 = vsel %vm528, %v659, %v671
          %v673 = vsel %vm530, %v663, %v672
          %v674 = vsel %vm532, %v667, %v673
          %v676 = vsel %vm535, %v674, 0.0
          %677 = vadd.xlane.f32.xlu0 %v676
          %v678 = vpop.xlane.xlu0 %677
          %v680 = vlaneseq
          %v681 = vshrl.u32 %v680, 7
          %v682 = vsub.s32 0, %v681
          %v683 = vrot.slane %v678, %v682
          %v684 = vlaneseq
          %v685 = vshrl.u32 %v684, 7
          %v686 = vsub.s32 1, %v685
          %v687 = vrot.slane %v678, %v686
          %v688 = vlaneseq
          %v689 = vshrl.u32 %v688, 7
          %v690 = vsub.s32 2, %v689
          %v691 = vrot.slane %v678, %v690
          %v692 = vlaneseq
          %v693 = vshrl.u32 %v692, 7
          %v694 = vsub.s32 3, %v693
          %v695 = vrot.slane %v678, %v694
          %v696 = vlaneseq
          %v697 = vshrl.u32 %v696, 7
          %v698 = vsub.s32 4, %v697
          %v699 = vrot.slane %v678, %v698
          %v700 = vlaneseq
          %v701 = vshrl.u32 %v700, 7
          %v702 = vsub.s32 5, %v701
          %v703 = vrot.slane %v678, %v702
          %v704 = vlaneseq
          %v705 = vshrl.u32 %v704, 7
          %v706 = vsub.s32 6, %v705
          %v707 = vrot.slane %v678, %v706
          %v708 = vlaneseq
          %v709 = vshrl.u32 %v708, 7
          %v710 = vsub.s32 7, %v709
          %v711 = vrot.slane %v678, %v710
          %v720 = vrcp.pop %v683
          %v721 = vmul.f32 %v589, %v720
          %v722 = vrcp.pop %v687
          %v723 = vmul.f32 %v591, %v722
          %v724 = vrcp.pop %v691
          %v725 = vmul.f32 %v593, %v724
          %v726 = vrcp.pop %v695
          %v727 = vmul.f32 %v595, %v726
          %v728 = vrcp.pop %v699
          %v729 = vmul.f32 %v597, %v728
          %v730 = vrcp.pop %v703
          %v731 = vmul.f32 %v599, %v730
          %v732 = vrcp.pop %v707
          %v733 = vmul.f32 %v601, %v732
          %v734 = vrcp.pop %v711
          %v735 = vmul.f32 %v603, %v734
          %737 = vset.pattern.permute.xlu0 0
          %738 = vperm.xlu0 %737, %v721
          %v739 = vpop.permute.xlu0 %738
          %742 = vset.pattern.permute.xlu0 0
          %743 = vperm.xlu0 %742, %v723
          %v744 = vpop.permute.xlu0 %743
          %747 = vset.pattern.permute.xlu0 0
          %748 = vperm.xlu0 %747, %v725
          %v749 = vpop.permute.xlu0 %748
          %752 = vset.pattern.permute.xlu0 0
          %753 = vperm.xlu0 %752, %v727
          %v754 = vpop.permute.xlu0 %753
          %757 = vset.pattern.permute.xlu0 0
          %758 = vperm.xlu0 %757, %v729
          %v759 = vpop.permute.xlu0 %758
          %762 = vset.pattern.permute.xlu0 0
          %763 = vperm.xlu0 %762, %v731
          %v764 = vpop.permute.xlu0 %763
          %767 = vset.pattern.permute.xlu0 0
          %768 = vperm.xlu0 %767, %v733
          %v769 = vpop.permute.xlu0 %768
          %772 = vset.pattern.permute.xlu0 0
          %773 = vperm.xlu0 %772, %v735
          %v774 = vpop.permute.xlu0 %773
          %v776 = vmul.f32 %v332, %v739
          %v777 = vmul.f32 %v333, %v744
          %v778 = vmul.f32 %v334, %v749
          %v779 = vmul.f32 %v335, %v754
          %v780 = vmul.f32 %v336, %v759
          %v781 = vmul.f32 %v337, %v764
          %v782 = vmul.f32 %v338, %v769
          %v783 = vmul.f32 %v339, %v774
          %v784 = vsel %vm356, %v776, 0.0
          %v785 = vrot.slane %v784, 4
          %v786 = vadd.f32 %v784, %v785
          %v787 = vrot.slane %v786, 2
          %v788 = vadd.f32 %v786, %v787
          %v789 = vrot.slane %v788, 1
          %v790 = vadd.f32 %v788, %v789
          %v791 = vsel %vm356, %v777, 0.0
          %v792 = vrot.slane %v791, 4
          %v793 = vadd.f32 %v791, %v792
          %v794 = vrot.slane %v793, 2
          %v795 = vadd.f32 %v793, %v794
          %v796 = vrot.slane %v795, 1
          %v797 = vadd.f32 %v795, %v796
          %v798 = vsel %vm356, %v778, 0.0
          %v799 = vrot.slane %v798, 4
          %v800 = vadd.f32 %v798, %v799
          %v801 = vrot.slane %v800, 2
          %v802 = vadd.f32 %v800, %v801
          %v803 = vrot.slane %v802, 1
          %v804 = vadd.f32 %v802, %v803
          %v805 = vsel %vm356, %v779, 0.0
          %v806 = vrot.slane %v805, 4
          %v807 = vadd.f32 %v805, %v806
          %v808 = vrot.slane %v807, 2
          %v809 = vadd.f32 %v807, %v808
          %v810 = vrot.slane %v809, 1
          %v811 = vadd.f32 %v809, %v810
          %v812 = vsel %vm356, %v780, 0.0
          %v813 = vrot.slane %v812, 4
          %v814 = vadd.f32 %v812, %v813
          %v815 = vrot.slane %v814, 2
          %v816 = vadd.f32 %v814, %v815
          %v817 = vrot.slane %v816, 1
          %v818 = vadd.f32 %v816, %v817
          %v819 = vsel %vm356, %v781, 0.0
          %v820 = vrot.slane %v819, 4
          %v821 = vadd.f32 %v819, %v820
          %v822 = vrot.slane %v821, 2
          %v823 = vadd.f32 %v821, %v822
          %v824 = vrot.slane %v823, 1
          %v825 = vadd.f32 %v823, %v824
          %v826 = vsel %vm356, %v782, 0.0
          %v827 = vrot.slane %v826, 4
          %v828 = vadd.f32 %v826, %v827
          %v829 = vrot.slane %v828, 2
          %v830 = vadd.f32 %v828, %v829
          %v831 = vrot.slane %v830, 1
          %v832 = vadd.f32 %v830, %v831
          %v833 = vsel %vm356, %v783, 0.0
          %v834 = vrot.slane %v833, 4
          %v835 = vadd.f32 %v833, %v834
          %v836 = vrot.slane %v835, 2
          %v837 = vadd.f32 %v835, %v836
          %v838 = vrot.slane %v837, 1
          %v839 = vadd.f32 %v837, %v838
          %v848 = vsel %vm520, %v797, %v790
          %v849 = vsel %vm522, %v804, %v848
          %v850 = vsel %vm524, %v811, %v849
          %v851 = vsel %vm526, %v818, %v850
          %v852 = vsel %vm528, %v825, %v851
          %v853 = vsel %vm530, %v832, %v852
          %v854 = vsel %vm532, %v839, %v853
          %856 = vst.msk [vmem:[#allocation2] sm:$0xff] %vm356, %v854
        $region52: #{tpu_custom_call.1} parent=39 // pred_fallthru
          _
        %v857 = vld [vmem:[#allocation2] sm:$0xff]
        %v858 = vld [vmem:[%s281] sm:$0xff]
        %v859 = vld [vmem:[%s281 + $0x8] sm:$0xff]
        %v860 = vld [vmem:[%s281 + $0x10] sm:$0xff]
        %v861 = vld [vmem:[%s281 + $0x18] sm:$0xff]
        %v862 = vld [vmem:[%s281 + $0x20] sm:$0xff]
        %v863 = vld [vmem:[%s281 + $0x28] sm:$0xff]
        %v864 = vld [vmem:[%s281 + $0x30] sm:$0xff]
        %v865 = vld [vmem:[%s281 + $0x38] sm:$0xff]
        %v866 = vld [vmem:[%s327] sm:$0x1]
        %v868 = vlaneseq
        %v869 = vshrl.u32 %v868, 7
        %v870 = vsub.s32 0, %v869
        %v871 = vrot.slane %v866, %v870
        %vm873 = vcmask 523264
        %v875 = vsel %vm873, %v857, 0
        %877 = vmatprep.subr.mxu0 0.0
        %878 = vmatpush1.msra.mxu0 %v858
        %879 = vmatprep.subr.mxu0 0.0
        %880 = vmatpush1.msra.mxu0 %v859
        %881 = vmatprep.subr.mxu0 0.0
        %882 = vmatpush1.msra.mxu0 %v860
        %883 = vmatprep.subr.mxu0 0.0
        %884 = vmatpush1.msra.mxu0 %v861
        %885 = vmatprep.subr.mxu0 0.0
        %886 = vmatpush1.msra.mxu0 %v862
        %887 = vmatprep.subr.mxu0 0.0
        %888 = vmatpush1.msra.mxu0 %v863
        %889 = vmatprep.subr.mxu0 0.0
        %890 = vmatpush1.msra.mxu0 %v864
        %891 = vmatprep.subr.mxu0 0.0
        %892 = vmatpush1.msra.mxu0 %v865
        %893 = vmatprep.subr.mxu0 0.0
        %894 = vmatpush1.msra.mxu0 0.0
        %895 = vmatprep.subr.mxu0 0.0
        %896 = vmatpush1.msra.mxu0 0.0
        %897 = vmatprep.subr.mxu0 0.0
        %898 = vmatpush1.msra.mxu0 0.0
        %899 = vmatprep.subr.mxu0 0.0
        %900 = vmatpush1.msra.mxu0 0.0
        %901 = vmatprep.subr.mxu0 0.0
        %902 = vmatpush1.msra.mxu0 0.0
        %903 = vmatprep.subr.mxu0 0.0
        %904 = vmatpush1.msra.mxu0 0.0
        %905 = vmatprep.subr.mxu0 0.0
        %906 = vmatpush1.msra.mxu0 0.0
        %907 = vmatprep.subr.mxu0 0.0
        %908 = vmatpush1.msra.mxu0 0.0
        %909 = vmatprep.subr.mxu0 0.0
        %910 = vmatpush1.msra.mxu0 0.0
        %911 = vmatprep.subr.mxu0 0.0
        %912 = vmatpush1.msra.mxu0 0.0
        %913 = vmatprep.subr.mxu0 0.0
        %914 = vmatpush1.msra.mxu0 0.0
        %915 = vmatprep.subr.mxu0 0.0
        %916 = vmatpush1.msra.mxu0 0.0
        %917 = vmatprep.subr.mxu0 0.0
        %918 = vmatpush1.msra.mxu0 0.0
        %919 = vmatprep.subr.mxu0 0.0
        %920 = vmatpush1.msra.mxu0 0.0
        %921 = vmatprep.subr.mxu0 0.0
        %922 = vmatpush1.msra.mxu0 0.0
        %923 = vmatprep.subr.mxu0 0.0
        %924 = vmatpush1.msra.mxu0 0.0
        %925 = vmatprep.subr.mxu0 0.0
        %926 = vmatpush1.msra.mxu0 0.0
        %927 = vmatprep.subr.mxu0 0.0
        %928 = vmatpush1.msra.mxu0 0.0
        %929 = vmatprep.subr.mxu0 0.0
        %930 = vmatpush1.msra.mxu0 0.0
        %931 = vmatprep.subr.mxu0 0.0
        %932 = vmatpush1.msra.mxu0 0.0
        %933 = vmatprep.subr.mxu0 0.0
        %934 = vmatpush1.msra.mxu0 0.0
        %935 = vmatprep.subr.mxu0 0.0
        %936 = vmatpush1.msra.mxu0 0.0
        %937 = vmatprep.subr.mxu0 0.0
        %938 = vmatpush1.msra.mxu0 0.0
        %939 = vmatprep.subr.mxu0 0.0
        %940 = vmatpush1.msra.mxu0 0.0
        %941 = vmatprep.mubr.f32.mxu0 0.0
        %942 = vmatmul.mubr.f32.gmra.mrb[0].mxu0 %v875
        %v943 = vpop.f32.mrb[0].mxu0
        %v944 = vadd.f32 %v871, %v943
        %v945 = vpop.f32.mrb[0].mxu0
        %946 = vdwg.mxu0
        %947 = vst [vmem:[%s319] sm:$0xff] %v944
        %s948 = sand.u32 %s172, 1
        %s949 = scalar_lea.sflag [#allocation5], %s948
        %s950 = sand.u32 %s172, 1
        %s951 = smul.addr %s950, 8
        %s952 = scalar_lea.vmem [#allocation8], %s951
        // Predicated region
        $region53: #{tpu_custom_call.1} parent=39 // pred_check
          %p953 = pneg %p182
        $region54: #{tpu_custom_call.1} parent=39 // pred_check_branch
          %955 = sbr.rel (%p953) target = $region56
        $region55: #{tpu_custom_call.1} parent=39 // pred_region
          %s957 = ssub.s32 128, 128
          %958 = vsyncadd %s949, %s957
          %s959 = smul.addr %s29, 2
          %s960 = sadd.s32 %s30, %s959
          %s961 = smul.addr %s960, 128
          %s962 = scalar_lea.hbm %s5, %s961
          %s964 = sshll.u32 %s952, 4
          %s965 = int_to_ptr.vmem [resolvable:$true] %s964
          %967 = dma.vmem_to_hbm [thread:$0]  %s965, 128, %s962, %s949
        $region56: #{tpu_custom_call.1} parent=39 // pred_fallthru
          _
      $region40: #{tpu_custom_call.1} parent=5 // pred_fallthru
        _
      %p968 = scmp.le.s32.totalorder 2, %s20
      // Predicated region
      $region57: #{tpu_custom_call.1} parent=5 // pred_check
        %p969 = pneg %p968
      $region58: #{tpu_custom_call.1} parent=5 // pred_check_branch
        %971 = sbr.rel (%p969) target = $region60
      $region59: #{tpu_custom_call.1} parent=5 // pred_region
        %s972 = ssub.s32 %s20, 2
        // Predicated region
        $region61: #{tpu_custom_call.1} parent=59 // pred_check
          %p973 = pneg %p188
        $region62: #{tpu_custom_call.1} parent=59 // pred_check_branch
          %975 = sbr.rel (%p973) target = $region64
        $region63: #{tpu_custom_call.1} parent=59 // pred_region
          %s976 = sand.u32 %s173, 1
          %s977 = scalar_lea.sflag [#allocation5], %s976
          %s978 = sand.u32 %s173, 1
          %s979 = smul.addr %s978, 8
          %s980 = scalar_lea.vmem [#allocation8], %s979
          %981 = dma.done %s977, 128
        $region64: #{tpu_custom_call.1} parent=59 // pred_fallthru
          _
      $region60: #{tpu_custom_call.1} parent=5 // pred_fallthru
        _
    $region6: #{tpu_custom_call.1} parent=1 // loop_footer
      %s24 = sadd.s32 1, %s20
    $region7: #{tpu_custom_call.1} parent=1 // loop_footer_branch
      %19 = sbr.rel target = $region3
    $region8: #{tpu_custom_call.1} parent=1 // loop_exit
      _
    %982 = vsyncpa [#allocation4], 1
    %s983 = scalar_lea.sflag [#allocation4], 1
    %984 = vsyncpa %s983, 1
    %985 = vsyncpa [#allocation7], 1
    %s986 = scalar_lea.sflag [#allocation7], 1
    %987 = vsyncpa %s986, 1
    %988 = vsyncpa [#allocation5], 1
    %s989 = scalar_lea.sflag [#allocation5], 1
    %990 = vsyncpa %s989, 1

</llo_original>
